<compile_context>
chip_gen: v7x
topology: tpu7x:2x2x1
jax: 0.10.0
libtpu: 0.0.40
codegen_flags: <defaults>
</compile_context>

<pallas_src>
import functools

import jax
import jax.numpy as jnp
from jax import lax
from jax.experimental import pallas as pl
from jax.experimental.pallas import tpu as pltpu


# ----------------------------------------------------------------------------
# Fused kernel: all LSTM layers + final Linear
# ----------------------------------------------------------------------------
def fused_lstm_fc_kernel(x_ref, w_ih_ref, w_hh_ref, b_ref, w_fc_ref, b_fc_ref,
                         y_ref, seq_scr, gx_scr, h_scr, c_scr):
    """
    x_ref    : (T, B_pad, D_pad)  bf16 time-major input (features zero-padded)
    w_ih_ref : (L, D_pad, 4H)     bf16 transposed input-hidden weights (i,f,g,o)
    w_hh_ref : (L, H, 4H)         bf16 transposed hidden-hidden weights
    b_ref    : (L, 1, 4H)         f32  combined bias (b_ih + b_hh)
    w_fc_ref : (H, Do_pad)        bf16 transposed FC weight (cols zero-padded)
    b_fc_ref : (1, Do_pad)        f32  FC bias (zero-padded)
    y_ref    : (B_pad, Do_pad)    f32  output
    seq_scr  : (T, B_pad, D_pad)  bf16 current layer's input/output sequence
    gx_scr   : (T, B_pad, 4H)     f32  hoisted input projections (gates_x)
    h_scr    : (B_pad, H)         f32  recurrent hidden state
    c_scr    : (B_pad, H)         f32  recurrent cell state
    """
    T, Bp, Dp = x_ref.shape
    L = w_ih_ref.shape[0]
    H = w_hh_ref.shape[1]

    # Layer-0 input (already bf16 / padded) into the resident sequence buffer.
    seq_scr[...] = x_ref[...]

    def layer_body(l, carry):
        w_ih = w_ih_ref[l]          # (Dp, 4H) bf16
        w_hh = w_hh_ref[l]          # (H, 4H)  bf16
        b = b_ref[l]                # (1, 4H)  f32

        # Hoisted input projection: one large MXU matmul over all timesteps.
        xs = seq_scr[...].reshape(T * Bp, Dp)                       # bf16
        gx = jnp.dot(xs, w_ih, preferred_element_type=jnp.float32) + b
        gx_scr[...] = gx.reshape(T, Bp, 4 * H)

        h_scr[...] = jnp.zeros_like(h_scr)
        c_scr[...] = jnp.zeros_like(c_scr)

        def step(t, inner_carry):
            # Only the truly sequential dependency stays in the loop.
            gates = gx_scr[t] + jnp.dot(
                h_scr[...].astype(jnp.bfloat16), w_hh,
                preferred_element_type=jnp.float32)                 # (Bp, 4H) f32
            i_g = jax.nn.sigmoid(gates[:, 0 * H:1 * H])
            f_g = jax.nn.sigmoid(gates[:, 1 * H:2 * H])
            g_g = jnp.tanh(gates[:, 2 * H:3 * H])
            o_g = jax.nn.sigmoid(gates[:, 3 * H:4 * H])

            c_new = f_g * c_scr[...] + i_g * g_g                    # f32 state math
            h_new = o_g * jnp.tanh(c_new)

            c_scr[...] = c_new
            h_scr[...] = h_new
            if Dp == H:
                seq_scr[t] = h_new.astype(seq_scr.dtype)
            else:
                seq_scr[t, :, :H] = h_new.astype(seq_scr.dtype)
            return inner_carry

        lax.fori_loop(0, T, step, 0, unroll=True)
        return carry

    lax.fori_loop(0, L, layer_body, 0)

    # Final Linear fused on the last hidden state (still resident in VMEM).
    y = (jnp.dot(h_scr[...].astype(jnp.bfloat16), w_fc_ref[...],
                 preferred_element_type=jnp.float32) + b_fc_ref[...])
    y_ref[...] = y.astype(y_ref.dtype)


_VMEM_SPEC = pl.BlockSpec(memory_space=pltpu.MemorySpace.VMEM)


def _round_up(n, m):
    return (n + m - 1) // m * m


# ----------------------------------------------------------------------------
# Wrapper
# ----------------------------------------------------------------------------
@jax.jit
def forest_intelligence_forward(x, packed_params):
    """x: (B, T, input_size) batch-first float32, like the PyTorch module."""
    w_ih_all, w_hh_all, b_all, w_fc_t, b_fc = packed_params
    B, T, D_in = x.shape
    L, Dp, H4 = w_ih_all.shape
    H = H4 // 4
    Do_pad = w_fc_t.shape[1]

    Bp = _round_up(B, 8)  # full f32 sublane tiles, unmasked stores

    x_tm = jnp.transpose(x, (1, 0, 2))                       # (T, B, D_in)
    x_tm = jnp.pad(x_tm, ((0, 0), (0, Bp - B), (0, Dp - D_in)))
    x_tm = x_tm.astype(jnp.bfloat16)

    y = pl.pallas_call(
        fused_lstm_fc_kernel,
        out_shape=jax.ShapeDtypeStruct((Bp, Do_pad), jnp.float32),
        in_specs=[_VMEM_SPEC] * 6,
        out_specs=_VMEM_SPEC,
        scratch_shapes=[
            pltpu.VMEM((T, Bp, Dp), jnp.bfloat16),    # layer i/o sequence
            pltpu.VMEM((T, Bp, 4 * H), jnp.float32),  # hoisted gates_x
            pltpu.VMEM((Bp, H), jnp.float32),         # h state
            pltpu.VMEM((Bp, H), jnp.float32),         # c state
        ],
    )(x_tm, w_ih_all, w_hh_all, b_all, w_fc_t, b_fc)

    D_out = w_fc_t.shape[0]  # FC maps H -> input_size; slice valid columns
    return y[:B, :D_in]


# ----------------------------------------------------------------------------
# Parameter construction (PyTorch nn.LSTM / nn.Linear shapes) + packing
# ----------------------------------------------------------------------------
def init_params(key, input_size, hidden_size, num_layers):
    """Returns PyTorch-shaped f32 params."""
    k = 1.0 / jnp.sqrt(hidden_size)
    lstm_layers = []
    for layer in range(num_layers):
        d_in = input_size if layer == 0 else hidden_size
        key, k1, k2, k3, k4 = jax.random.split(key, 5)
        w_ih = jax.random.uniform(k1, (4 * hidden_size, d_in), jnp.float32, -k, k)
        w_hh = jax.random.uniform(k2, (4 * hidden_size, hidden_size), jnp.float32, -k, k)
        b_ih = jax.random.uniform(k3, (4 * hidden_size,), jnp.float32, -k, k)
        b_hh = jax.random.uniform(k4, (4 * hidden_size,), jnp.float32, -k, k)
        lstm_layers.append((w_ih, w_hh, b_ih, b_hh))
    key, k5, k6 = jax.random.split(key, 3)
    w_fc = jax.random.uniform(k5, (input_size, hidden_size), jnp.float32, -k, k)
    b_fc = jax.random.uniform(k6, (input_size,), jnp.float32, -k, k)
    return lstm_layers, (w_fc, b_fc)


def pack_params(lstm_layers, fc_params, input_size, hidden_size):
    """Transpose, pad, stack and cast weights for the fused kernel."""
    H = hidden_size
    Dp = _round_up(max(input_size, H), 128)   # common padded input width
    w_ih_all, w_hh_all, b_all = [], [], []
    for (w_ih, w_hh, b_ih, b_hh) in lstm_layers:
        d_in = w_ih.shape[1]
        w_ih_t = jnp.zeros((Dp, 4 * H), jnp.float32).at[:d_in, :].set(w_ih.T)
        w_ih_all.append(w_ih_t)
        w_hh_all.append(w_hh.T)
        b_all.append((b_ih + b_hh).reshape(1, 4 * H))
    w_fc, b_fc = fc_params                    # (D_out, H), (D_out,)
    D_out = w_fc.shape[0]
    Do_pad = _round_up(D_out, 128)            # lane-dense output store
    w_fc_t = jnp.zeros((H, Do_pad), jnp.float32).at[:, :D_out].set(w_fc.T)
    b_fc_p = jnp.zeros((1, Do_pad), jnp.float32).at[0, :D_out].set(b_fc)
    return (jnp.stack(w_ih_all).astype(jnp.bfloat16),
            jnp.stack(w_hh_all).astype(jnp.bfloat16),
            jnp.stack(b_all),
            w_fc_t.astype(jnp.bfloat16),
            b_fc_p)


# ----------------------------------------------------------------------------
# Pure-JAX f32 reference for correctness checking
# ----------------------------------------------------------------------------
def reference_forward(x, lstm_layers, fc_params):
    B, T, _ = x.shape
    h_seq = x
    for (w_ih, w_hh, b_ih, b_hh) in lstm_layers:
        H = w_hh.shape[1]
        h = jnp.zeros((B, H), jnp.float32)
        c = jnp.zeros((B, H), jnp.float32)
        outs = []
        for t in range(T):
            gates = h_seq[:, t, :] @ w_ih.T + h @ w_hh.T + b_ih + b_hh
            i = jax.nn.sigmoid(gates[:, :H])
            f = jax.nn.sigmoid(gates[:, H:2 * H])
            g = jnp.tanh(gates[:, 2 * H:3 * H])
            o = jax.nn.sigmoid(gates[:, 3 * H:4 * H])
            c = f * c + i * g
            h = o * jnp.tanh(c)
            outs.append(h)
        h_seq = jnp.stack(outs, axis=1)
    w_fc, b_fc = fc_params
    return h_seq[:, -1, :] @ w_fc.T + b_fc


# ----------------------------------------------------------------------------
if __name__ == "__main__":
    BATCH = 2
    SEQ = 8
    INPUT_SIZE = 32
    HIDDEN_SIZE = 128
    NUM_LAYERS = 3   # module default is 12; kept small for the demo run

    key = jax.random.PRNGKey(0)
    key, xk, pk = jax.random.split(key, 3)
    x = jax.random.normal(xk, (BATCH, SEQ, INPUT_SIZE), jnp.float32)

    lstm_layers, fc_params = init_params(pk, INPUT_SIZE, HIDDEN_SIZE, NUM_LAYERS)
    packed = pack_params(lstm_layers, fc_params, INPUT_SIZE, HIDDEN_SIZE)

    out = forest_intelligence_forward(x, packed)
    out = jax.block_until_ready(out)

    ref = reference_forward(x, lstm_layers, fc_params)
    assert out.shape == (BATCH, INPUT_SIZE), out.shape
    # bf16 MXU operands (f32 accumulation / f32 state math) -> loosened tol.
    assert jnp.allclose(out, ref, rtol=3e-2, atol=3e-2), (
        float(jnp.max(jnp.abs(out - ref)))
    )

    print("KERNEL_OK")
</pallas_src>

<mosaic_0001>
module attributes {stable_mosaic.version = 11 : i64} {
  func.func @fused_lstm_fc_kernel(%arg0: memref<8x8x128xbf16, #tpu.memory_space<vmem>>, %arg1: memref<3x128x512xbf16, #tpu.memory_space<vmem>>, %arg2: memref<3x128x512xbf16, #tpu.memory_space<vmem>>, %arg3: memref<3x1x512xf32, #tpu.memory_space<vmem>>, %arg4: memref<128x128xbf16, #tpu.memory_space<vmem>>, %arg5: memref<1x128xf32, #tpu.memory_space<vmem>>, %arg6: memref<8x128xf32, #tpu.memory_space<vmem>>, %arg7: memref<8x8x128xbf16, #tpu.memory_space<vmem>>, %arg8: memref<8x8x512xf32, #tpu.memory_space<vmem>>, %arg9: memref<8x128xf32, #tpu.memory_space<vmem>>, %arg10: memref<8x128xf32, #tpu.memory_space<vmem>>) attributes {dimension_semantics = [], scalar_prefetch = 0 : i64, scratch_operands = 4 : i64, tpu.core_type = #tpu.core_type<tc>} {
    %c0 = arith.constant 0 : index
    %c0_0 = arith.constant 0 : index
    %c0_1 = arith.constant 0 : index
    %0 = vector.load %arg0[%c0, %c0_0, %c0_1] : memref<8x8x128xbf16, #tpu.memory_space<vmem>>, vector<8x8x128xbf16>
    %c0_2 = arith.constant 0 : index
    %c0_3 = arith.constant 0 : index
    %c0_4 = arith.constant 0 : index
    %1 = vector.load %arg7[%c0_2, %c0_3, %c0_4] : memref<8x8x128xbf16, #tpu.memory_space<vmem>>, vector<8x8x128xbf16>
    tpu.vector_store %arg7[%c0_2, %c0_3, %c0_4], %0 {strides = array<i32>} : memref<8x8x128xbf16, #tpu.memory_space<vmem>>, vector<8x8x128xbf16>,
    %c0_i32 = arith.constant 0 : i32
    %c3_i32 = arith.constant 3 : i32
    %2 = arith.addi %c0_i32, %c3_i32 : i32
    %c1_i32 = arith.constant 1 : i32
    scf.for %arg11 = %c0_i32 to %2 step %c1_i32  : i32 {
      %11 = arith.index_cast %arg11 : i32 to index
      %c0_14 = arith.constant 0 : index
      %c0_15 = arith.constant 0 : index
      %12 = vector.load %arg1[%11, %c0_14, %c0_15] : memref<3x128x512xbf16, #tpu.memory_space<vmem>>, vector<1x128x512xbf16>
      %13 = vector.shape_cast %12 : vector<1x128x512xbf16> to vector<128x512xbf16>
      %14 = arith.index_cast %arg11 : i32 to index
      %c0_16 = arith.constant 0 : index
      %c0_17 = arith.constant 0 : index
      %15 = vector.load %arg2[%14, %c0_16, %c0_17] : memref<3x128x512xbf16, #tpu.memory_space<vmem>>, vector<1x128x512xbf16>
      %16 = vector.shape_cast %15 : vector<1x128x512xbf16> to vector<128x512xbf16>
      %17 = arith.index_cast %arg11 : i32 to index
      %c0_18 = arith.constant 0 : index
      %c0_19 = arith.constant 0 : index
      %18 = vector.load %arg3[%17, %c0_18, %c0_19] : memref<3x1x512xf32, #tpu.memory_space<vmem>>, vector<1x1x512xf32>
      %19 = vector.shape_cast %18 : vector<1x1x512xf32> to vector<1x512xf32>
      %c0_20 = arith.constant 0 : index
      %c0_21 = arith.constant 0 : index
      %c0_22 = arith.constant 0 : index
      %20 = vector.load %arg7[%c0_20, %c0_21, %c0_22] : memref<8x8x128xbf16, #tpu.memory_space<vmem>>, vector<8x8x128xbf16>
      %21 = vector.shape_cast %20 : vector<8x8x128xbf16> to vector<64x128xbf16>
      %cst_23 = arith.constant dense<0.000000e+00> : vector<64x512xf32>
      %22 = tpu.matmul %21, %13, %cst_23 {dimension_numbers = #tpu.dot_dimension_numbers<[1], [0], [0], [1], [0, 0, 1, 1], [], []>} : vector<64x128xbf16>, vector<128x512xbf16>, vector<64x512xf32> -> vector<64x512xf32>
      %23 = vector.broadcast %19 : vector<1x512xf32> to vector<64x512xf32>
      %24 = arith.addf %22, %23 : vector<64x512xf32>
      %25 = vector.shape_cast %24 : vector<64x512xf32> to vector<8x8x512xf32>
      %c0_24 = arith.constant 0 : index
      %c0_25 = arith.constant 0 : index
      %c0_26 = arith.constant 0 : index
      %26 = vector.load %arg8[%c0_24, %c0_25, %c0_26] : memref<8x8x512xf32, #tpu.memory_space<vmem>>, vector<8x8x512xf32>
      tpu.vector_store %arg8[%c0_24, %c0_25, %c0_26], %25 {strides = array<i32>} : memref<8x8x512xf32, #tpu.memory_space<vmem>>, vector<8x8x512xf32>,
      %cst_27 = arith.constant 0.000000e+00 : f32
      %27 = vector.broadcast %cst_27 : f32 to vector<8x128xf32>
      %c0_28 = arith.constant 0 : index
      %c0_29 = arith.constant 0 : index
      %28 = vector.load %arg9[%c0_28, %c0_29] : memref<8x128xf32, #tpu.memory_space<vmem>>, vector<8x128xf32>
      tpu.vector_store %arg9[%c0_28, %c0_29], %27 {strides = array<i32>} : memref<8x128xf32, #tpu.memory_space<vmem>>, vector<8x128xf32>,
      %cst_30 = arith.constant 0.000000e+00 : f32
      %29 = vector.broadcast %cst_30 : f32 to vector<8x128xf32>
      %c0_31 = arith.constant 0 : index
      %c0_32 = arith.constant 0 : index
      %30 = vector.load %arg10[%c0_31, %c0_32] : memref<8x128xf32, #tpu.memory_space<vmem>>, vector<8x128xf32>
      tpu.vector_store %arg10[%c0_31, %c0_32], %29 {strides = array<i32>} : memref<8x128xf32, #tpu.memory_space<vmem>>, vector<8x128xf32>,
      %c0_i32_33 = arith.constant 0 : i32
      %31 = arith.index_cast %c0_i32_33 : i32 to index
      %c0_34 = arith.constant 0 : index
      %c0_35 = arith.constant 0 : index
      %32 = vector.load %arg8[%31, %c0_34, %c0_35] : memref<8x8x512xf32, #tpu.memory_space<vmem>>, vector<1x8x512xf32>
      %33 = vector.shape_cast %32 : vector<1x8x512xf32> to vector<8x512xf32>
      %c0_36 = arith.constant 0 : index
      %c0_37 = arith.constant 0 : index
      %34 = vector.load %arg9[%c0_36, %c0_37] : memref<8x128xf32, #tpu.memory_space<vmem>>, vector<8x128xf32>
      %35 = arith.truncf %34 : vector<8x128xf32> to vector<8x128xbf16>
      %cst_38 = arith.constant dense<0.000000e+00> : vector<8x512xf32>
      %36 = tpu.matmul %35, %16, %cst_38 {dimension_numbers = #tpu.dot_dimension_numbers<[1], [0], [0], [1], [0, 0, 1, 1], [], []>} : vector<8x128xbf16>, vector<128x512xbf16>, vector<8x512xf32> -> vector<8x512xf32>
      %37 = arith.addf %33, %36 : vector<8x512xf32>
      %38 = vector.extract_strided_slice %37 {offsets = [0, 0], sizes = [8, 128], strides = [1, 1]} : vector<8x512xf32> to vector<8x128xf32>
      %39 = arith.negf %38 : vector<8x128xf32>
      %40 = math.exp %39 : vector<8x128xf32>
      %cst_39 = arith.constant 1.000000e+00 : f32
      %41 = vector.broadcast %cst_39 : f32 to vector<8x128xf32>
      %42 = arith.addf %41, %40 : vector<8x128xf32>
      %43 = arith.divf %41, %42 : vector<8x128xf32>
      %44 = vector.extract_strided_slice %37 {offsets = [0, 128], sizes = [8, 128], strides = [1, 1]} : vector<8x512xf32> to vector<8x128xf32>
      %45 = arith.negf %44 : vector<8x128xf32>
      %46 = math.exp %45 : vector<8x128xf32>
      %cst_40 = arith.constant 1.000000e+00 : f32
      %47 = vector.broadcast %cst_40 : f32 to vector<8x128xf32>
      %48 = arith.addf %47, %46 : vector<8x128xf32>
      %49 = arith.divf %47, %48 : vector<8x128xf32>
      %50 = vector.extract_strided_slice %37 {offsets = [0, 256], sizes = [8, 128], strides = [1, 1]} : vector<8x512xf32> to vector<8x128xf32>
      %51 = math.tanh %50 : vector<8x128xf32>
      %52 = vector.extract_strided_slice %37 {offsets = [0, 384], sizes = [8, 128], strides = [1, 1]} : vector<8x512xf32> to vector<8x128xf32>
      %53 = arith.negf %52 : vector<8x128xf32>
      %54 = math.exp %53 : vector<8x128xf32>
      %cst_41 = arith.constant 1.000000e+00 : f32
      %55 = vector.broadcast %cst_41 : f32 to vector<8x128xf32>
      %56 = arith.addf %55, %54 : vector<8x128xf32>
      %57 = arith.divf %55, %56 : vector<8x128xf32>
      %c0_42 = arith.constant 0 : index
      %c0_43 = arith.constant 0 : index
      %58 = vector.load %arg10[%c0_42, %c0_43] : memref<8x128xf32, #tpu.memory_space<vmem>>, vector<8x128xf32>
      %59 = arith.mulf %49, %58 : vector<8x128xf32>
      %60 = arith.mulf %43, %51 : vector<8x128xf32>
      %61 = arith.addf %59, %60 : vector<8x128xf32>
      %62 = math.tanh %61 : vector<8x128xf32>
      %63 = arith.mulf %57, %62 : vector<8x128xf32>
      %c0_44 = arith.constant 0 : index
      %c0_45 = arith.constant 0 : index
      %64 = vector.load %arg10[%c0_44, %c0_45] : memref<8x128xf32, #tpu.memory_space<vmem>>, vector<8x128xf32>
      tpu.vector_store %arg10[%c0_44, %c0_45], %61 {strides = array<i32>} : memref<8x128xf32, #tpu.memory_space<vmem>>, vector<8x128xf32>,
      %c0_46 = arith.constant 0 : index
      %c0_47 = arith.constant 0 : index
      %65 = vector.load %arg9[%c0_46, %c0_47] : memref<8x128xf32, #tpu.memory_space<vmem>>, vector<8x128xf32>
      tpu.vector_store %arg9[%c0_46, %c0_47], %63 {strides = array<i32>} : memref<8x128xf32, #tpu.memory_space<vmem>>, vector<8x128xf32>,
      %66 = arith.truncf %63 : vector<8x128xf32> to vector<8x128xbf16>
      %67 = arith.index_cast %c0_i32_33 : i32 to index
      %c0_48 = arith.constant 0 : index
      %c0_49 = arith.constant 0 : index
      %68 = vector.load %arg7[%67, %c0_48, %c0_49] : memref<8x8x128xbf16, #tpu.memory_space<vmem>>, vector<1x8x128xbf16>
      %69 = vector.shape_cast %68 : vector<1x8x128xbf16> to vector<8x128xbf16>
      %70 = vector.shape_cast %66 : vector<8x128xbf16> to vector<1x8x128xbf16>
      tpu.vector_store %arg7[%67, %c0_48, %c0_49], %70 {strides = array<i32>} : memref<8x8x128xbf16, #tpu.memory_space<vmem>>, vector<1x8x128xbf16>,
      %c1_i32_50 = arith.constant 1 : i32
      %71 = arith.index_cast %c1_i32_50 : i32 to index
      %c0_51 = arith.constant 0 : index
      %c0_52 = arith.constant 0 : index
      %72 = vector.load %arg8[%71, %c0_51, %c0_52] : memref<8x8x512xf32, #tpu.memory_space<vmem>>, vector<1x8x512xf32>
      %73 = vector.shape_cast %72 : vector<1x8x512xf32> to vector<8x512xf32>
      %c0_53 = arith.constant 0 : index
      %c0_54 = arith.constant 0 : index
      %74 = vector.load %arg9[%c0_53, %c0_54] : memref<8x128xf32, #tpu.memory_space<vmem>>, vector<8x128xf32>
      %75 = arith.truncf %74 : vector<8x128xf32> to vector<8x128xbf16>
      %cst_55 = arith.constant dense<0.000000e+00> : vector<8x512xf32>
      %76 = tpu.matmul %75, %16, %cst_55 {dimension_numbers = #tpu.dot_dimension_numbers<[1], [0], [0], [1], [0, 0, 1, 1], [], []>} : vector<8x128xbf16>, vector<128x512xbf16>, vector<8x512xf32> -> vector<8x512xf32>
      %77 = arith.addf %73, %76 : vector<8x512xf32>
      %78 = vector.extract_strided_slice %77 {offsets = [0, 0], sizes = [8, 128], strides = [1, 1]} : vector<8x512xf32> to vector<8x128xf32>
      %79 = arith.negf %78 : vector<8x128xf32>
      %80 = math.exp %79 : vector<8x128xf32>
      %cst_56 = arith.constant 1.000000e+00 : f32
      %81 = vector.broadcast %cst_56 : f32 to vector<8x128xf32>
      %82 = arith.addf %81, %80 : vector<8x128xf32>
      %83 = arith.divf %81, %82 : vector<8x128xf32>
      %84 = vector.extract_strided_slice %77 {offsets = [0, 128], sizes = [8, 128], strides = [1, 1]} : vector<8x512xf32> to vector<8x128xf32>
      %85 = arith.negf %84 : vector<8x128xf32>
      %86 = math.exp %85 : vector<8x128xf32>
      %cst_57 = arith.constant 1.000000e+00 : f32
      %87 = vector.broadcast %cst_57 : f32 to vector<8x128xf32>
      %88 = arith.addf %87, %86 : vector<8x128xf32>
      %89 = arith.divf %87, %88 : vector<8x128xf32>
      %90 = vector.extract_strided_slice %77 {offsets = [0, 256], sizes = [8, 128], strides = [1, 1]} : vector<8x512xf32> to vector<8x128xf32>
      %91 = math.tanh %90 : vector<8x128xf32>
      %92 = vector.extract_strided_slice %77 {offsets = [0, 384], sizes = [8, 128], strides = [1, 1]} : vector<8x512xf32> to vector<8x128xf32>
      %93 = arith.negf %92 : vector<8x128xf32>
      %94 = math.exp %93 : vector<8x128xf32>
      %cst_58 = arith.constant 1.000000e+00 : f32
      %95 = vector.broadcast %cst_58 : f32 to vector<8x128xf32>
      %96 = arith.addf %95, %94 : vector<8x128xf32>
      %97 = arith.divf %95, %96 : vector<8x128xf32>
      %c0_59 = arith.constant 0 : index
      %c0_60 = arith.constant 0 : index
      %98 = vector.load %arg10[%c0_59, %c0_60] : memref<8x128xf32, #tpu.memory_space<vmem>>, vector<8x128xf32>
      %99 = arith.mulf %89, %98 : vector<8x128xf32>
      %100 = arith.mulf %83, %91 : vector<8x128xf32>
      %101 = arith.addf %99, %100 : vector<8x128xf32>
      %102 = math.tanh %101 : vector<8x128xf32>
      %103 = arith.mulf %97, %102 : vector<8x128xf32>
      %c0_61 = arith.constant 0 : index
      %c0_62 = arith.constant 0 : index
      %104 = vector.load %arg10[%c0_61, %c0_62] : memref<8x128xf32, #tpu.memory_space<vmem>>, vector<8x128xf32>
      tpu.vector_store %arg10[%c0_61, %c0_62], %101 {strides = array<i32>} : memref<8x128xf32, #tpu.memory_space<vmem>>, vector<8x128xf32>,
      %c0_63 = arith.constant 0 : index
      %c0_64 = arith.constant 0 : index
      %105 = vector.load %arg9[%c0_63, %c0_64] : memref<8x128xf32, #tpu.memory_space<vmem>>, vector<8x128xf32>
      tpu.vector_store %arg9[%c0_63, %c0_64], %103 {strides = array<i32>} : memref<8x128xf32, #tpu.memory_space<vmem>>, vector<8x128xf32>,
      %106 = arith.truncf %103 : vector<8x128xf32> to vector<8x128xbf16>
      %107 = arith.index_cast %c1_i32_50 : i32 to index
      %c0_65 = arith.constant 0 : index
      %c0_66 = arith.constant 0 : index
      %108 = vector.load %arg7[%107, %c0_65, %c0_66] : memref<8x8x128xbf16, #tpu.memory_space<vmem>>, vector<1x8x128xbf16>
      %109 = vector.shape_cast %108 : vector<1x8x128xbf16> to vector<8x128xbf16>
      %110 = vector.shape_cast %106 : vector<8x128xbf16> to vector<1x8x128xbf16>
      tpu.vector_store %arg7[%107, %c0_65, %c0_66], %110 {strides = array<i32>} : memref<8x8x128xbf16, #tpu.memory_space<vmem>>, vector<1x8x128xbf16>,
      %c2_i32 = arith.constant 2 : i32
      %111 = arith.index_cast %c2_i32 : i32 to index
      %c0_67 = arith.constant 0 : index
      %c0_68 = arith.constant 0 : index
      %112 = vector.load %arg8[%111, %c0_67, %c0_68] : memref<8x8x512xf32, #tpu.memory_space<vmem>>, vector<1x8x512xf32>
      %113 = vector.shape_cast %112 : vector<1x8x512xf32> to vector<8x512xf32>
      %c0_69 = arith.constant 0 : index
      %c0_70 = arith.constant 0 : index
      %114 = vector.load %arg9[%c0_69, %c0_70] : memref<8x128xf32, #tpu.memory_space<vmem>>, vector<8x128xf32>
      %115 = arith.truncf %114 : vector<8x128xf32> to vector<8x128xbf16>
      %cst_71 = arith.constant dense<0.000000e+00> : vector<8x512xf32>
      %116 = tpu.matmul %115, %16, %cst_71 {dimension_numbers = #tpu.dot_dimension_numbers<[1], [0], [0], [1], [0, 0, 1, 1], [], []>} : vector<8x128xbf16>, vector<128x512xbf16>, vector<8x512xf32> -> vector<8x512xf32>
      %117 = arith.addf %113, %116 : vector<8x512xf32>
      %118 = vector.extract_strided_slice %117 {offsets = [0, 0], sizes = [8, 128], strides = [1, 1]} : vector<8x512xf32> to vector<8x128xf32>
      %119 = arith.negf %118 : vector<8x128xf32>
      %120 = math.exp %119 : vector<8x128xf32>
      %cst_72 = arith.constant 1.000000e+00 : f32
      %121 = vector.broadcast %cst_72 : f32 to vector<8x128xf32>
      %122 = arith.addf %121, %120 : vector<8x128xf32>
      %123 = arith.divf %121, %122 : vector<8x128xf32>
      %124 = vector.extract_strided_slice %117 {offsets = [0, 128], sizes = [8, 128], strides = [1, 1]} : vector<8x512xf32> to vector<8x128xf32>
      %125 = arith.negf %124 : vector<8x128xf32>
      %126 = math.exp %125 : vector<8x128xf32>
      %cst_73 = arith.constant 1.000000e+00 : f32
      %127 = vector.broadcast %cst_73 : f32 to vector<8x128xf32>
      %128 = arith.addf %127, %126 : vector<8x128xf32>
      %129 = arith.divf %127, %128 : vector<8x128xf32>
      %130 = vector.extract_strided_slice %117 {offsets = [0, 256], sizes = [8, 128], strides = [1, 1]} : vector<8x512xf32> to vector<8x128xf32>
      %131 = math.tanh %130 : vector<8x128xf32>
      %132 = vector.extract_strided_slice %117 {offsets = [0, 384], sizes = [8, 128], strides = [1, 1]} : vector<8x512xf32> to vector<8x128xf32>
      %133 = arith.negf %132 : vector<8x128xf32>
      %134 = math.exp %133 : vector<8x128xf32>
      %cst_74 = arith.constant 1.000000e+00 : f32
      %135 = vector.broadcast %cst_74 : f32 to vector<8x128xf32>
      %136 = arith.addf %135, %134 : vector<8x128xf32>
      %137 = arith.divf %135, %136 : vector<8x128xf32>
      %c0_75 = arith.constant 0 : index
      %c0_76 = arith.constant 0 : index
      %138 = vector.load %arg10[%c0_75, %c0_76] : memref<8x128xf32, #tpu.memory_space<vmem>>, vector<8x128xf32>
      %139 = arith.mulf %129, %138 : vector<8x128xf32>
      %140 = arith.mulf %123, %131 : vector<8x128xf32>
      %141 = arith.addf %139, %140 : vector<8x128xf32>
      %142 = math.tanh %141 : vector<8x128xf32>
      %143 = arith.mulf %137, %142 : vector<8x128xf32>
      %c0_77 = arith.constant 0 : index
      %c0_78 = arith.constant 0 : index
      %144 = vector.load %arg10[%c0_77, %c0_78] : memref<8x128xf32, #tpu.memory_space<vmem>>, vector<8x128xf32>
      tpu.vector_store %arg10[%c0_77, %c0_78], %141 {strides = array<i32>} : memref<8x128xf32, #tpu.memory_space<vmem>>, vector<8x128xf32>,
      %c0_79 = arith.constant 0 : index
      %c0_80 = arith.constant 0 : index
      %145 = vector.load %arg9[%c0_79, %c0_80] : memref<8x128xf32, #tpu.memory_space<vmem>>, vector<8x128xf32>
      tpu.vector_store %arg9[%c0_79, %c0_80], %143 {strides = array<i32>} : memref<8x128xf32, #tpu.memory_space<vmem>>, vector<8x128xf32>,
      %146 = arith.truncf %143 : vector<8x128xf32> to vector<8x128xbf16>
      %147 = arith.index_cast %c2_i32 : i32 to index
      %c0_81 = arith.constant 0 : index
      %c0_82 = arith.constant 0 : index
      %148 = vector.load %arg7[%147, %c0_81, %c0_82] : memref<8x8x128xbf16, #tpu.memory_space<vmem>>, vector<1x8x128xbf16>
      %149 = vector.shape_cast %148 : vector<1x8x128xbf16> to vector<8x128xbf16>
      %150 = vector.shape_cast %146 : vector<8x128xbf16> to vector<1x8x128xbf16>
      tpu.vector_store %arg7[%147, %c0_81, %c0_82], %150 {strides = array<i32>} : memref<8x8x128xbf16, #tpu.memory_space<vmem>>, vector<1x8x128xbf16>,
      %c3_i32_83 = arith.constant 3 : i32
      %151 = arith.index_cast %c3_i32_83 : i32 to index
      %c0_84 = arith.constant 0 : index
      %c0_85 = arith.constant 0 : index
      %152 = vector.load %arg8[%151, %c0_84, %c0_85] : memref<8x8x512xf32, #tpu.memory_space<vmem>>, vector<1x8x512xf32>
      %153 = vector.shape_cast %152 : vector<1x8x512xf32> to vector<8x512xf32>
      %c0_86 = arith.constant 0 : index
      %c0_87 = arith.constant 0 : index
      %154 = vector.load %arg9[%c0_86, %c0_87] : memref<8x128xf32, #tpu.memory_space<vmem>>, vector<8x128xf32>
      %155 = arith.truncf %154 : vector<8x128xf32> to vector<8x128xbf16>
      %cst_88 = arith.constant dense<0.000000e+00> : vector<8x512xf32>
      %156 = tpu.matmul %155, %16, %cst_88 {dimension_numbers = #tpu.dot_dimension_numbers<[1], [0], [0], [1], [0, 0, 1, 1], [], []>} : vector<8x128xbf16>, vector<128x512xbf16>, vector<8x512xf32> -> vector<8x512xf32>
      %157 = arith.addf %153, %156 : vector<8x512xf32>
      %158 = vector.extract_strided_slice %157 {offsets = [0, 0], sizes = [8, 128], strides = [1, 1]} : vector<8x512xf32> to vector<8x128xf32>
      %159 = arith.negf %158 : vector<8x128xf32>
      %160 = math.exp %159 : vector<8x128xf32>
      %cst_89 = arith.constant 1.000000e+00 : f32
      %161 = vector.broadcast %cst_89 : f32 to vector<8x128xf32>
      %162 = arith.addf %161, %160 : vector<8x128xf32>
      %163 = arith.divf %161, %162 : vector<8x128xf32>
      %164 = vector.extract_strided_slice %157 {offsets = [0, 128], sizes = [8, 128], strides = [1, 1]} : vector<8x512xf32> to vector<8x128xf32>
      %165 = arith.negf %164 : vector<8x128xf32>
      %166 = math.exp %165 : vector<8x128xf32>
      %cst_90 = arith.constant 1.000000e+00 : f32
      %167 = vector.broadcast %cst_90 : f32 to vector<8x128xf32>
      %168 = arith.addf %167, %166 : vector<8x128xf32>
      %169 = arith.divf %167, %168 : vector<8x128xf32>
      %170 = vector.extract_strided_slice %157 {offsets = [0, 256], sizes = [8, 128], strides = [1, 1]} : vector<8x512xf32> to vector<8x128xf32>
      %171 = math.tanh %170 : vector<8x128xf32>
      %172 = vector.extract_strided_slice %157 {offsets = [0, 384], sizes = [8, 128], strides = [1, 1]} : vector<8x512xf32> to vector<8x128xf32>
      %173 = arith.negf %172 : vector<8x128xf32>
      %174 = math.exp %173 : vector<8x128xf32>
      %cst_91 = arith.constant 1.000000e+00 : f32
      %175 = vector.broadcast %cst_91 : f32 to vector<8x128xf32>
      %176 = arith.addf %175, %174 : vector<8x128xf32>
      %177 = arith.divf %175, %176 : vector<8x128xf32>
      %c0_92 = arith.constant 0 : index
      %c0_93 = arith.constant 0 : index
      %178 = vector.load %arg10[%c0_92, %c0_93] : memref<8x128xf32, #tpu.memory_space<vmem>>, vector<8x128xf32>
      %179 = arith.mulf %169, %178 : vector<8x128xf32>
      %180 = arith.mulf %163, %171 : vector<8x128xf32>
      %181 = arith.addf %179, %180 : vector<8x128xf32>
      %182 = math.tanh %181 : vector<8x128xf32>
      %183 = arith.mulf %177, %182 : vector<8x128xf32>
      %c0_94 = arith.constant 0 : index
      %c0_95 = arith.constant 0 : index
      %184 = vector.load %arg10[%c0_94, %c0_95] : memref<8x128xf32, #tpu.memory_space<vmem>>, vector<8x128xf32>
      tpu.vector_store %arg10[%c0_94, %c0_95], %181 {strides = array<i32>} : memref<8x128xf32, #tpu.memory_space<vmem>>, vector<8x128xf32>,
      %c0_96 = arith.constant 0 : index
      %c0_97 = arith.constant 0 : index
      %185 = vector.load %arg9[%c0_96, %c0_97] : memref<8x128xf32, #tpu.memory_space<vmem>>, vector<8x128xf32>
      tpu.vector_store %arg9[%c0_96, %c0_97], %183 {strides = array<i32>} : memref<8x128xf32, #tpu.memory_space<vmem>>, vector<8x128xf32>,
      %186 = arith.truncf %183 : vector<8x128xf32> to vector<8x128xbf16>
      %187 = arith.index_cast %c3_i32_83 : i32 to index
      %c0_98 = arith.constant 0 : index
      %c0_99 = arith.constant 0 : index
      %188 = vector.load %arg7[%187, %c0_98, %c0_99] : memref<8x8x128xbf16, #tpu.memory_space<vmem>>, vector<1x8x128xbf16>
      %189 = vector.shape_cast %188 : vector<1x8x128xbf16> to vector<8x128xbf16>
      %190 = vector.shape_cast %186 : vector<8x128xbf16> to vector<1x8x128xbf16>
      tpu.vector_store %arg7[%187, %c0_98, %c0_99], %190 {strides = array<i32>} : memref<8x8x128xbf16, #tpu.memory_space<vmem>>, vector<1x8x128xbf16>,
      %c4_i32 = arith.constant 4 : i32
      %191 = arith.index_cast %c4_i32 : i32 to index
      %c0_100 = arith.constant 0 : index
      %c0_101 = arith.constant 0 : index
      %192 = vector.load %arg8[%191, %c0_100, %c0_101] : memref<8x8x512xf32, #tpu.memory_space<vmem>>, vector<1x8x512xf32>
      %193 = vector.shape_cast %192 : vector<1x8x512xf32> to vector<8x512xf32>
      %c0_102 = arith.constant 0 : index
      %c0_103 = arith.constant 0 : index
      %194 = vector.load %arg9[%c0_102, %c0_103] : memref<8x128xf32, #tpu.memory_space<vmem>>, vector<8x128xf32>
      %195 = arith.truncf %194 : vector<8x128xf32> to vector<8x128xbf16>
      %cst_104 = arith.constant dense<0.000000e+00> : vector<8x512xf32>
      %196 = tpu.matmul %195, %16, %cst_104 {dimension_numbers = #tpu.dot_dimension_numbers<[1], [0], [0], [1], [0, 0, 1, 1], [], []>} : vector<8x128xbf16>, vector<128x512xbf16>, vector<8x512xf32> -> vector<8x512xf32>
      %197 = arith.addf %193, %196 : vector<8x512xf32>
      %198 = vector.extract_strided_slice %197 {offsets = [0, 0], sizes = [8, 128], strides = [1, 1]} : vector<8x512xf32> to vector<8x128xf32>
      %199 = arith.negf %198 : vector<8x128xf32>
      %200 = math.exp %199 : vector<8x128xf32>
      %cst_105 = arith.constant 1.000000e+00 : f32
      %201 = vector.broadcast %cst_105 : f32 to vector<8x128xf32>
      %202 = arith.addf %201, %200 : vector<8x128xf32>
      %203 = arith.divf %201, %202 : vector<8x128xf32>
      %204 = vector.extract_strided_slice %197 {offsets = [0, 128], sizes = [8, 128], strides = [1, 1]} : vector<8x512xf32> to vector<8x128xf32>
      %205 = arith.negf %204 : vector<8x128xf32>
      %206 = math.exp %205 : vector<8x128xf32>
      %cst_106 = arith.constant 1.000000e+00 : f32
      %207 = vector.broadcast %cst_106 : f32 to vector<8x128xf32>
      %208 = arith.addf %207, %206 : vector<8x128xf32>
      %209 = arith.divf %207, %208 : vector<8x128xf32>
      %210 = vector.extract_strided_slice %197 {offsets = [0, 256], sizes = [8, 128], strides = [1, 1]} : vector<8x512xf32> to vector<8x128xf32>
      %211 = math.tanh %210 : vector<8x128xf32>
      %212 = vector.extract_strided_slice %197 {offsets = [0, 384], sizes = [8, 128], strides = [1, 1]} : vector<8x512xf32> to vector<8x128xf32>
      %213 = arith.negf %212 : vector<8x128xf32>
      %214 = math.exp %213 : vector<8x128xf32>
      %cst_107 = arith.constant 1.000000e+00 : f32
      %215 = vector.broadcast %cst_107 : f32 to vector<8x128xf32>
      %216 = arith.addf %215, %214 : vector<8x128xf32>
      %217 = arith.divf %215, %216 : vector<8x128xf32>
      %c0_108 = arith.constant 0 : index
      %c0_109 = arith.constant 0 : index
      %218 = vector.load %arg10[%c0_108, %c0_109] : memref<8x128xf32, #tpu.memory_space<vmem>>, vector<8x128xf32>
      %219 = arith.mulf %209, %218 : vector<8x128xf32>
      %220 = arith.mulf %203, %211 : vector<8x128xf32>
      %221 = arith.addf %219, %220 : vector<8x128xf32>
      %222 = math.tanh %221 : vector<8x128xf32>
      %223 = arith.mulf %217, %222 : vector<8x128xf32>
      %c0_110 = arith.constant 0 : index
      %c0_111 = arith.constant 0 : index
      %224 = vector.load %arg10[%c0_110, %c0_111] : memref<8x128xf32, #tpu.memory_space<vmem>>, vector<8x128xf32>
      tpu.vector_store %arg10[%c0_110, %c0_111], %221 {strides = array<i32>} : memref<8x128xf32, #tpu.memory_space<vmem>>, vector<8x128xf32>,
      %c0_112 = arith.constant 0 : index
      %c0_113 = arith.constant 0 : index
      %225 = vector.load %arg9[%c0_112, %c0_113] : memref<8x128xf32, #tpu.memory_space<vmem>>, vector<8x128xf32>
      tpu.vector_store %arg9[%c0_112, %c0_113], %223 {strides = array<i32>} : memref<8x128xf32, #tpu.memory_space<vmem>>, vector<8x128xf32>,
      %226 = arith.truncf %223 : vector<8x128xf32> to vector<8x128xbf16>
      %227 = arith.index_cast %c4_i32 : i32 to index
      %c0_114 = arith.constant 0 : index
      %c0_115 = arith.constant 0 : index
      %228 = vector.load %arg7[%227, %c0_114, %c0_115] : memref<8x8x128xbf16, #tpu.memory_space<vmem>>, vector<1x8x128xbf16>
      %229 = vector.shape_cast %228 : vector<1x8x128xbf16> to vector<8x128xbf16>
      %230 = vector.shape_cast %226 : vector<8x128xbf16> to vector<1x8x128xbf16>
      tpu.vector_store %arg7[%227, %c0_114, %c0_115], %230 {strides = array<i32>} : memref<8x8x128xbf16, #tpu.memory_space<vmem>>, vector<1x8x128xbf16>,
      %c5_i32 = arith.constant 5 : i32
      %231 = arith.index_cast %c5_i32 : i32 to index
      %c0_116 = arith.constant 0 : index
      %c0_117 = arith.constant 0 : index
      %232 = vector.load %arg8[%231, %c0_116, %c0_117] : memref<8x8x512xf32, #tpu.memory_space<vmem>>, vector<1x8x512xf32>
      %233 = vector.shape_cast %232 : vector<1x8x512xf32> to vector<8x512xf32>
      %c0_118 = arith.constant 0 : index
      %c0_119 = arith.constant 0 : index
      %234 = vector.load %arg9[%c0_118, %c0_119] : memref<8x128xf32, #tpu.memory_space<vmem>>, vector<8x128xf32>
      %235 = arith.truncf %234 : vector<8x128xf32> to vector<8x128xbf16>
      %cst_120 = arith.constant dense<0.000000e+00> : vector<8x512xf32>
      %236 = tpu.matmul %235, %16, %cst_120 {dimension_numbers = #tpu.dot_dimension_numbers<[1], [0], [0], [1], [0, 0, 1, 1], [], []>} : vector<8x128xbf16>, vector<128x512xbf16>, vector<8x512xf32> -> vector<8x512xf32>
      %237 = arith.addf %233, %236 : vector<8x512xf32>
      %238 = vector.extract_strided_slice %237 {offsets = [0, 0], sizes = [8, 128], strides = [1, 1]} : vector<8x512xf32> to vector<8x128xf32>
      %239 = arith.negf %238 : vector<8x128xf32>
      %240 = math.exp %239 : vector<8x128xf32>
      %cst_121 = arith.constant 1.000000e+00 : f32
      %241 = vector.broadcast %cst_121 : f32 to vector<8x128xf32>
      %242 = arith.addf %241, %240 : vector<8x128xf32>
      %243 = arith.divf %241, %242 : vector<8x128xf32>
      %244 = vector.extract_strided_slice %237 {offsets = [0, 128], sizes = [8, 128], strides = [1, 1]} : vector<8x512xf32> to vector<8x128xf32>
      %245 = arith.negf %244 : vector<8x128xf32>
      %246 = math.exp %245 : vector<8x128xf32>
      %cst_122 = arith.constant 1.000000e+00 : f32
      %247 = vector.broadcast %cst_122 : f32 to vector<8x128xf32>
      %248 = arith.addf %247, %246 : vector<8x128xf32>
      %249 = arith.divf %247, %248 : vector<8x128xf32>
      %250 = vector.extract_strided_slice %237 {offsets = [0, 256], sizes = [8, 128], strides = [1, 1]} : vector<8x512xf32> to vector<8x128xf32>
      %251 = math.tanh %250 : vector<8x128xf32>
      %252 = vector.extract_strided_slice %237 {offsets = [0, 384], sizes = [8, 128], strides = [1, 1]} : vector<8x512xf32> to vector<8x128xf32>
      %253 = arith.negf %252 : vector<8x128xf32>
      %254 = math.exp %253 : vector<8x128xf32>
      %cst_123 = arith.constant 1.000000e+00 : f32
      %255 = vector.broadcast %cst_123 : f32 to vector<8x128xf32>
      %256 = arith.addf %255, %254 : vector<8x128xf32>
      %257 = arith.divf %255, %256 : vector<8x128xf32>
      %c0_124 = arith.constant 0 : index
      %c0_125 = arith.constant 0 : index
      %258 = vector.load %arg10[%c0_124, %c0_125] : memref<8x128xf32, #tpu.memory_space<vmem>>, vector<8x128xf32>
      %259 = arith.mulf %249, %258 : vector<8x128xf32>
      %260 = arith.mulf %243, %251 : vector<8x128xf32>
      %261 = arith.addf %259, %260 : vector<8x128xf32>
      %262 = math.tanh %261 : vector<8x128xf32>
      %263 = arith.mulf %257, %262 : vector<8x128xf32>
      %c0_126 = arith.constant 0 : index
      %c0_127 = arith.constant 0 : index
      %264 = vector.load %arg10[%c0_126, %c0_127] : memref<8x128xf32, #tpu.memory_space<vmem>>, vector<8x128xf32>
      tpu.vector_store %arg10[%c0_126, %c0_127], %261 {strides = array<i32>} : memref<8x128xf32, #tpu.memory_space<vmem>>, vector<8x128xf32>,
      %c0_128 = arith.constant 0 : index
      %c0_129 = arith.constant 0 : index
      %265 = vector.load %arg9[%c0_128, %c0_129] : memref<8x128xf32, #tpu.memory_space<vmem>>, vector<8x128xf32>
      tpu.vector_store %arg9[%c0_128, %c0_129], %263 {strides = array<i32>} : memref<8x128xf32, #tpu.memory_space<vmem>>, vector<8x128xf32>,
      %266 = arith.truncf %263 : vector<8x128xf32> to vector<8x128xbf16>
      %267 = arith.index_cast %c5_i32 : i32 to index
      %c0_130 = arith.constant 0 : index
      %c0_131 = arith.constant 0 : index
      %268 = vector.load %arg7[%267, %c0_130, %c0_131] : memref<8x8x128xbf16, #tpu.memory_space<vmem>>, vector<1x8x128xbf16>
      %269 = vector.shape_cast %268 : vector<1x8x128xbf16> to vector<8x128xbf16>
      %270 = vector.shape_cast %266 : vector<8x128xbf16> to vector<1x8x128xbf16>
      tpu.vector_store %arg7[%267, %c0_130, %c0_131], %270 {strides = array<i32>} : memref<8x8x128xbf16, #tpu.memory_space<vmem>>, vector<1x8x128xbf16>,
      %c6_i32 = arith.constant 6 : i32
      %271 = arith.index_cast %c6_i32 : i32 to index
      %c0_132 = arith.constant 0 : index
      %c0_133 = arith.constant 0 : index
      %272 = vector.load %arg8[%271, %c0_132, %c0_133] : memref<8x8x512xf32, #tpu.memory_space<vmem>>, vector<1x8x512xf32>
      %273 = vector.shape_cast %272 : vector<1x8x512xf32> to vector<8x512xf32>
      %c0_134 = arith.constant 0 : index
      %c0_135 = arith.constant 0 : index
      %274 = vector.load %arg9[%c0_134, %c0_135] : memref<8x128xf32, #tpu.memory_space<vmem>>, vector<8x128xf32>
      %275 = arith.truncf %274 : vector<8x128xf32> to vector<8x128xbf16>
      %cst_136 = arith.constant dense<0.000000e+00> : vector<8x512xf32>
      %276 = tpu.matmul %275, %16, %cst_136 {dimension_numbers = #tpu.dot_dimension_numbers<[1], [0], [0], [1], [0, 0, 1, 1], [], []>} : vector<8x128xbf16>, vector<128x512xbf16>, vector<8x512xf32> -> vector<8x512xf32>
      %277 = arith.addf %273, %276 : vector<8x512xf32>
      %278 = vector.extract_strided_slice %277 {offsets = [0, 0], sizes = [8, 128], strides = [1, 1]} : vector<8x512xf32> to vector<8x128xf32>
      %279 = arith.negf %278 : vector<8x128xf32>
      %280 = math.exp %279 : vector<8x128xf32>
      %cst_137 = arith.constant 1.000000e+00 : f32
      %281 = vector.broadcast %cst_137 : f32 to vector<8x128xf32>
      %282 = arith.addf %281, %280 : vector<8x128xf32>
      %283 = arith.divf %281, %282 : vector<8x128xf32>
      %284 = vector.extract_strided_slice %277 {offsets = [0, 128], sizes = [8, 128], strides = [1, 1]} : vector<8x512xf32> to vector<8x128xf32>
      %285 = arith.negf %284 : vector<8x128xf32>
      %286 = math.exp %285 : vector<8x128xf32>
      %cst_138 = arith.constant 1.000000e+00 : f32
      %287 = vector.broadcast %cst_138 : f32 to vector<8x128xf32>
      %288 = arith.addf %287, %286 : vector<8x128xf32>
      %289 = arith.divf %287, %288 : vector<8x128xf32>
      %290 = vector.extract_strided_slice %277 {offsets = [0, 256], sizes = [8, 128], strides = [1, 1]} : vector<8x512xf32> to vector<8x128xf32>
      %291 = math.tanh %290 : vector<8x128xf32>
      %292 = vector.extract_strided_slice %277 {offsets = [0, 384], sizes = [8, 128], strides = [1, 1]} : vector<8x512xf32> to vector<8x128xf32>
      %293 = arith.negf %292 : vector<8x128xf32>
      %294 = math.exp %293 : vector<8x128xf32>
      %cst_139 = arith.constant 1.000000e+00 : f32
      %295 = vector.broadcast %cst_139 : f32 to vector<8x128xf32>
      %296 = arith.addf %295, %294 : vector<8x128xf32>
      %297 = arith.divf %295, %296 : vector<8x128xf32>
      %c0_140 = arith.constant 0 : index
      %c0_141 = arith.constant 0 : index
      %298 = vector.load %arg10[%c0_140, %c0_141] : memref<8x128xf32, #tpu.memory_space<vmem>>, vector<8x128xf32>
      %299 = arith.mulf %289, %298 : vector<8x128xf32>
      %300 = arith.mulf %283, %291 : vector<8x128xf32>
      %301 = arith.addf %299, %300 : vector<8x128xf32>
      %302 = math.tanh %301 : vector<8x128xf32>
      %303 = arith.mulf %297, %302 : vector<8x128xf32>
      %c0_142 = arith.constant 0 : index
      %c0_143 = arith.constant 0 : index
      %304 = vector.load %arg10[%c0_142, %c0_143] : memref<8x128xf32, #tpu.memory_space<vmem>>, vector<8x128xf32>
      tpu.vector_store %arg10[%c0_142, %c0_143], %301 {strides = array<i32>} : memref<8x128xf32, #tpu.memory_space<vmem>>, vector<8x128xf32>,
      %c0_144 = arith.constant 0 : index
      %c0_145 = arith.constant 0 : index
      %305 = vector.load %arg9[%c0_144, %c0_145] : memref<8x128xf32, #tpu.memory_space<vmem>>, vector<8x128xf32>
      tpu.vector_store %arg9[%c0_144, %c0_145], %303 {strides = array<i32>} : memref<8x128xf32, #tpu.memory_space<vmem>>, vector<8x128xf32>,
      %306 = arith.truncf %303 : vector<8x128xf32> to vector<8x128xbf16>
      %307 = arith.index_cast %c6_i32 : i32 to index
      %c0_146 = arith.constant 0 : index
      %c0_147 = arith.constant 0 : index
      %308 = vector.load %arg7[%307, %c0_146, %c0_147] : memref<8x8x128xbf16, #tpu.memory_space<vmem>>, vector<1x8x128xbf16>
      %309 = vector.shape_cast %308 : vector<1x8x128xbf16> to vector<8x128xbf16>
      %310 = vector.shape_cast %306 : vector<8x128xbf16> to vector<1x8x128xbf16>
      tpu.vector_store %arg7[%307, %c0_146, %c0_147], %310 {strides = array<i32>} : memref<8x8x128xbf16, #tpu.memory_space<vmem>>, vector<1x8x128xbf16>,
      %c7_i32 = arith.constant 7 : i32
      %311 = arith.index_cast %c7_i32 : i32 to index
      %c0_148 = arith.constant 0 : index
      %c0_149 = arith.constant 0 : index
      %312 = vector.load %arg8[%311, %c0_148, %c0_149] : memref<8x8x512xf32, #tpu.memory_space<vmem>>, vector<1x8x512xf32>
      %313 = vector.shape_cast %312 : vector<1x8x512xf32> to vector<8x512xf32>
      %c0_150 = arith.constant 0 : index
      %c0_151 = arith.constant 0 : index
      %314 = vector.load %arg9[%c0_150, %c0_151] : memref<8x128xf32, #tpu.memory_space<vmem>>, vector<8x128xf32>
      %315 = arith.truncf %314 : vector<8x128xf32> to vector<8x128xbf16>
      %cst_152 = arith.constant dense<0.000000e+00> : vector<8x512xf32>
      %316 = tpu.matmul %315, %16, %cst_152 {dimension_numbers = #tpu.dot_dimension_numbers<[1], [0], [0], [1], [0, 0, 1, 1], [], []>} : vector<8x128xbf16>, vector<128x512xbf16>, vector<8x512xf32> -> vector<8x512xf32>
      %317 = arith.addf %313, %316 : vector<8x512xf32>
      %318 = vector.extract_strided_slice %317 {offsets = [0, 0], sizes = [8, 128], strides = [1, 1]} : vector<8x512xf32> to vector<8x128xf32>
      %319 = arith.negf %318 : vector<8x128xf32>
      %320 = math.exp %319 : vector<8x128xf32>
      %cst_153 = arith.constant 1.000000e+00 : f32
      %321 = vector.broadcast %cst_153 : f32 to vector<8x128xf32>
      %322 = arith.addf %321, %320 : vector<8x128xf32>
      %323 = arith.divf %321, %322 : vector<8x128xf32>
      %324 = vector.extract_strided_slice %317 {offsets = [0, 128], sizes = [8, 128], strides = [1, 1]} : vector<8x512xf32> to vector<8x128xf32>
      %325 = arith.negf %324 : vector<8x128xf32>
      %326 = math.exp %325 : vector<8x128xf32>
      %cst_154 = arith.constant 1.000000e+00 : f32
      %327 = vector.broadcast %cst_154 : f32 to vector<8x128xf32>
      %328 = arith.addf %327, %326 : vector<8x128xf32>
      %329 = arith.divf %327, %328 : vector<8x128xf32>
      %330 = vector.extract_strided_slice %317 {offsets = [0, 256], sizes = [8, 128], strides = [1, 1]} : vector<8x512xf32> to vector<8x128xf32>
      %331 = math.tanh %330 : vector<8x128xf32>
      %332 = vector.extract_strided_slice %317 {offsets = [0, 384], sizes = [8, 128], strides = [1, 1]} : vector<8x512xf32> to vector<8x128xf32>
      %333 = arith.negf %332 : vector<8x128xf32>
      %334 = math.exp %333 : vector<8x128xf32>
      %cst_155 = arith.constant 1.000000e+00 : f32
      %335 = vector.broadcast %cst_155 : f32 to vector<8x128xf32>
      %336 = arith.addf %335, %334 : vector<8x128xf32>
      %337 = arith.divf %335, %336 : vector<8x128xf32>
      %c0_156 = arith.constant 0 : index
      %c0_157 = arith.constant 0 : index
      %338 = vector.load %arg10[%c0_156, %c0_157] : memref<8x128xf32, #tpu.memory_space<vmem>>, vector<8x128xf32>
      %339 = arith.mulf %329, %338 : vector<8x128xf32>
      %340 = arith.mulf %323, %331 : vector<8x128xf32>
      %341 = arith.addf %339, %340 : vector<8x128xf32>
      %342 = math.tanh %341 : vector<8x128xf32>
      %343 = arith.mulf %337, %342 : vector<8x128xf32>
      %c0_158 = arith.constant 0 : index
      %c0_159 = arith.constant 0 : index
      %344 = vector.load %arg10[%c0_158, %c0_159] : memref<8x128xf32, #tpu.memory_space<vmem>>, vector<8x128xf32>
      tpu.vector_store %arg10[%c0_158, %c0_159], %341 {strides = array<i32>} : memref<8x128xf32, #tpu.memory_space<vmem>>, vector<8x128xf32>,
      %c0_160 = arith.constant 0 : index
      %c0_161 = arith.constant 0 : index
      %345 = vector.load %arg9[%c0_160, %c0_161] : memref<8x128xf32, #tpu.memory_space<vmem>>, vector<8x128xf32>
      tpu.vector_store %arg9[%c0_160, %c0_161], %343 {strides = array<i32>} : memref<8x128xf32, #tpu.memory_space<vmem>>, vector<8x128xf32>,
      %346 = arith.truncf %343 : vector<8x128xf32> to vector<8x128xbf16>
      %347 = arith.index_cast %c7_i32 : i32 to index
      %c0_162 = arith.constant 0 : index
      %c0_163 = arith.constant 0 : index
      %348 = vector.load %arg7[%347, %c0_162, %c0_163] : memref<8x8x128xbf16, #tpu.memory_space<vmem>>, vector<1x8x128xbf16>
      %349 = vector.shape_cast %348 : vector<1x8x128xbf16> to vector<8x128xbf16>
      %350 = vector.shape_cast %346 : vector<8x128xbf16> to vector<1x8x128xbf16>
      tpu.vector_store %arg7[%347, %c0_162, %c0_163], %350 {strides = array<i32>} : memref<8x8x128xbf16, #tpu.memory_space<vmem>>, vector<1x8x128xbf16>,
      %c8_i32 = arith.constant 8 : i32
    }
    %c3_i32_5 = arith.constant 3 : i32
    %c0_6 = arith.constant 0 : index
    %c0_7 = arith.constant 0 : index
    %3 = vector.load %arg9[%c0_6, %c0_7] : memref<8x128xf32, #tpu.memory_space<vmem>>, vector<8x128xf32>
    %4 = arith.truncf %3 : vector<8x128xf32> to vector<8x128xbf16>
    %c0_8 = arith.constant 0 : index
    %c0_9 = arith.constant 0 : index
    %5 = vector.load %arg4[%c0_8, %c0_9] : memref<128x128xbf16, #tpu.memory_space<vmem>>, vector<128x128xbf16>
    %cst = arith.constant dense<0.000000e+00> : vector<8x128xf32>
    %6 = tpu.matmul %4, %5, %cst {dimension_numbers = #tpu.dot_dimension_numbers<[1], [0], [0], [1], [0, 0, 1, 1], [], []>} : vector<8x128xbf16>, vector<128x128xbf16>, vector<8x128xf32> -> vector<8x128xf32>
    %c0_10 = arith.constant 0 : index
    %c0_11 = arith.constant 0 : index
    %7 = vector.load %arg5[%c0_10, %c0_11] : memref<1x128xf32, #tpu.memory_space<vmem>>, vector<1x128xf32>
    %8 = vector.broadcast %7 : vector<1x128xf32> to vector<8x128xf32>
    %9 = arith.addf %6, %8 : vector<8x128xf32>
    %c0_12 = arith.constant 0 : index
    %c0_13 = arith.constant 0 : index
    %10 = vector.load %arg6[%c0_12, %c0_13] : memref<8x128xf32, #tpu.memory_space<vmem>>, vector<8x128xf32>
    tpu.vector_store %arg6[%c0_12, %c0_13], %9 {strides = array<i32>} : memref<8x128xf32, #tpu.memory_space<vmem>>, vector<8x128xf32>,
    return
  }
}

</mosaic_0001>

<llo_original>
// kernel: forest_intelligence_forward.1
$region0: #{forest_intelligence_forward.1}
  #allocation0 [shape = 'u32[]', space=smem, size = 0x4, offset = 0x4, fixed_abs, tag = 'smem constant byte address 0x4 - core index']
  #allocation1 [shape = 'u32[144,128]{1,0:T(1,128)}', space=vmem, size = 0x12000, scoped, tag = 'internal scratch']
  #allocation2 [shape = 'bf16[8,8,128]{2,1,0:T(8,128)(2,1)}', space=vmem, size = 0x4000, scoped, tag = 'scratch operand']
  #allocation3 [shape = 'f32[8,8,512]{2,1,0:T(8,128)}', space=vmem, size = 0x20000, scoped, tag = 'scratch operand']
  #allocation4 [shape = 'f32[8,128]{1,0:T(8,128)}', space=vmem, size = 0x1000, scoped, tag = 'scratch operand']
  #allocation5 [shape = 'f32[8,128]{1,0:T(8,128)}', space=vmem, size = 0x1000, scoped, tag = 'scratch operand']
  %s0 = inlined_call_operand.vmem [shape: bf16[8,8,128], index: 0, kind: input, shape index: {}]
  %s1 = inlined_call_operand.hbm [shape: bf16[3,128,512], index: 1, kind: input, shape index: {}]
  %s2 = inlined_call_operand.hbm [shape: bf16[3,128,512], index: 2, kind: input, shape index: {}]
  %s3 = inlined_call_operand.vmem [shape: f32[3,1,512], index: 3, kind: input, shape index: {}]
  %s4 = inlined_call_operand.vmem [shape: bf16[128,128], index: 4, kind: input, shape index: {}]
  %s5 = inlined_call_operand.vmem [shape: f32[1,128], index: 5, kind: input, shape index: {}]
  %s6 = inlined_call_operand.vmem [shape: f32[8,128], index: 6, kind: output, shape index: {}]
  %s7 = sld [smem:[#allocation0]]
  $region49: #{forest_intelligence_forward.1} parent=0
    _
  %s9 = ssub.s32 1, %s7
  %s10 = scalar_select 0, %s9, %s7
  $region1: #{forest_intelligence_forward.1} parent=0
    #allocation6 [shape = 'u8[393216]{0}', space=vmem, size = 0x60000, scoped, tag = 'input window, operand 1, single buffered']
    #allocation7 [shape = 's32[1]{0}', space=sflag, size = 0x4, scoped, tag = 'scoped memory for forest_intelligence_forward.1']
    #allocation8 [shape = 'u8[393216]{0}', space=vmem, size = 0x60000, scoped, tag = 'input window, operand 2, single buffered']
    #allocation9 [shape = 's32[1]{0}', space=sflag, size = 0x4, scoped, tag = 'scoped memory for forest_intelligence_forward.1']
    %11 = vsyncpa [#allocation7], 0
    %12 = vsyncpa [#allocation9], 0
    // Predicated region
    $region2: #{forest_intelligence_forward.1} parent=1 // pred_check
      _
    $region3: #{forest_intelligence_forward.1} parent=1 // pred_check_branch
      %14 = sbr.rel (0) target = $region5
    $region4: #{forest_intelligence_forward.1} parent=1 // pred_region
      _
    $region5: #{forest_intelligence_forward.1} parent=1 // pred_fallthru
      _
    // Predicated region
    $region6: #{forest_intelligence_forward.1} parent=1 // pred_check
      _
    $region7: #{forest_intelligence_forward.1} parent=1 // pred_check_branch
      %16 = sbr.rel (0) target = $region9
    $region8: #{forest_intelligence_forward.1} parent=1 // pred_region
      %s18 = ssub.s32 12288, 12288
      %19 = vsyncadd [#allocation7], %s18
      %s20 = sshll.u32 [#allocation6], 4
      %s21 = int_to_ptr.vmem [resolvable:$true] %s20
      %26 = dma.hbm_to_vmem [thread:$0]  %s1, 12288, %s21, [#allocation7], 256, 256, 16
    $region9: #{forest_intelligence_forward.1} parent=1 // pred_fallthru
      _
    // Predicated region
    $region10: #{forest_intelligence_forward.1} parent=1 // pred_check
      _
    $region11: #{forest_intelligence_forward.1} parent=1 // pred_check_branch
      %28 = sbr.rel (0) target = $region13
    $region12: #{forest_intelligence_forward.1} parent=1 // pred_region
      %s30 = ssub.s32 12288, 12288
      %31 = vsyncadd [#allocation9], %s30
      %s32 = sshll.u32 [#allocation8], 4
      %s33 = int_to_ptr.vmem [resolvable:$true] %s32
      %38 = dma.hbm_to_vmem [thread:$0]  %s2, 12288, %s33, [#allocation9], 256, 256, 16
    $region13: #{forest_intelligence_forward.1} parent=1 // pred_fallthru
      _
    // Predicated region
    $region14: #{forest_intelligence_forward.1} parent=1 // pred_check
      _
    $region15: #{forest_intelligence_forward.1} parent=1 // pred_check_branch
      %40 = sbr.rel (0) target = $region17
    $region16: #{forest_intelligence_forward.1} parent=1 // pred_region
      _
    $region17: #{forest_intelligence_forward.1} parent=1 // pred_fallthru
      _
    // Predicated region
    $region18: #{forest_intelligence_forward.1} parent=1 // pred_check
      _
    $region19: #{forest_intelligence_forward.1} parent=1 // pred_check_branch
      %42 = sbr.rel (0) target = $region21
    $region20: #{forest_intelligence_forward.1} parent=1 // pred_region
      _
    $region21: #{forest_intelligence_forward.1} parent=1 // pred_fallthru
      _
    // Predicated region
    $region22: #{forest_intelligence_forward.1} parent=1 // pred_check
      _
    $region23: #{forest_intelligence_forward.1} parent=1 // pred_check_branch
      %44 = sbr.rel (0) target = $region25
    $region24: #{forest_intelligence_forward.1} parent=1 // pred_region
      _
    $region25: #{forest_intelligence_forward.1} parent=1 // pred_fallthru
      _
    // Predicated region
    $region26: #{forest_intelligence_forward.1} parent=1 // pred_check
      _
    $region27: #{forest_intelligence_forward.1} parent=1 // pred_check_branch
      %46 = sbr.rel (0) target = $region29
    $region28: #{forest_intelligence_forward.1} parent=1 // pred_region
      %47 = dma.done [#allocation7], 12288
    $region29: #{forest_intelligence_forward.1} parent=1 // pred_fallthru
      _
    // Predicated region
    $region30: #{forest_intelligence_forward.1} parent=1 // pred_check
      _
    $region31: #{forest_intelligence_forward.1} parent=1 // pred_check_branch
      %49 = sbr.rel (0) target = $region33
    $region32: #{forest_intelligence_forward.1} parent=1 // pred_region
      %50 = dma.done [#allocation9], 12288
    $region33: #{forest_intelligence_forward.1} parent=1 // pred_fallthru
      _
    %v52 = vld [vmem:[%s0] sm:$0xf]
    %v53 = vld [vmem:[%s0 + $0x4] sm:$0xf]
    %v54 = vld [vmem:[%s0 + $0x8] sm:$0xf]
    %v55 = vld [vmem:[%s0 + $0xc] sm:$0xf]
    %v56 = vld [vmem:[%s0 + $0x10] sm:$0xf]
    %v57 = vld [vmem:[%s0 + $0x14] sm:$0xf]
    %v58 = vld [vmem:[%s0 + $0x18] sm:$0xf]
    %v59 = vld [vmem:[%s0 + $0x1c] sm:$0xf]
    %60 = vst [vmem:[#allocation2] sm:$0xf] %v52
    %61 = vst [vmem:[#allocation2 + $0x4] sm:$0xf] %v53
    %62 = vst [vmem:[#allocation2 + $0x8] sm:$0xf] %v54
    %63 = vst [vmem:[#allocation2 + $0xc] sm:$0xf] %v55
    %64 = vst [vmem:[#allocation2 + $0x10] sm:$0xf] %v56
    %65 = vst [vmem:[#allocation2 + $0x14] sm:$0xf] %v57
    %66 = vst [vmem:[#allocation2 + $0x18] sm:$0xf] %v58
    %67 = vst [vmem:[#allocation2 + $0x1c] sm:$0xf] %v59
    loop: start=0, step=1, limit=3
    $region34: #{forest_intelligence_forward.1} parent=1 // loop_pre_header
      _
    $region35: #{forest_intelligence_forward.1} parent=1 // loop_header
      %s69 = sphi 0, %s73
      %p70 = scmp.ge.s32.totalorder %s69, 3
    $region36: #{forest_intelligence_forward.1} parent=1 // loop_header_branch
      %72 = sbr.rel (%p70) target = $region40
    $region37: #{forest_intelligence_forward.1} parent=1 // loop_body
      %s74 = smul.u32 %s69, 64
      %s75 = smul.addr %s74, 4
      %s76 = scalar_lea.vmem [#allocation6], %s75
      %v77 = vld [vmem:[%s76] sm:$0xff]
      %v78 = vld [vmem:[%s76 + $0x8] sm:$0xff]
      %v79 = vld [vmem:[%s76 + $0x10] sm:$0xff]
      %v80 = vld [vmem:[%s76 + $0x18] sm:$0xff]
      %v81 = vld [vmem:[%s76 + $0x20] sm:$0xff]
      %v82 = vld [vmem:[%s76 + $0x28] sm:$0xff]
      %v83 = vld [vmem:[%s76 + $0x30] sm:$0xff]
      %v84 = vld [vmem:[%s76 + $0x38] sm:$0xff]
      %v85 = vld [vmem:[%s76 + $0x40] sm:$0xff]
      %v86 = vld [vmem:[%s76 + $0x48] sm:$0xff]
      %v87 = vld [vmem:[%s76 + $0x50] sm:$0xff]
      %v88 = vld [vmem:[%s76 + $0x58] sm:$0xff]
      %v89 = vld [vmem:[%s76 + $0x60] sm:$0xff]
      %v90 = vld [vmem:[%s76 + $0x68] sm:$0xff]
      %v91 = vld [vmem:[%s76 + $0x70] sm:$0xff]
      %v92 = vld [vmem:[%s76 + $0x78] sm:$0xff]
      %v93 = vld [vmem:[%s76 + $0x80] sm:$0xff]
      %v94 = vld [vmem:[%s76 + $0x88] sm:$0xff]
      %v95 = vld [vmem:[%s76 + $0x90] sm:$0xff]
      %v96 = vld [vmem:[%s76 + $0x98] sm:$0xff]
      %v97 = vld [vmem:[%s76 + $0xa0] sm:$0xff]
      %v98 = vld [vmem:[%s76 + $0xa8] sm:$0xff]
      %v99 = vld [vmem:[%s76 + $0xb0] sm:$0xff]
      %v100 = vld [vmem:[%s76 + $0xb8] sm:$0xff]
      %v101 = vld [vmem:[%s76 + $0xc0] sm:$0xff]
      %v102 = vld [vmem:[%s76 + $0xc8] sm:$0xff]
      %v103 = vld [vmem:[%s76 + $0xd0] sm:$0xff]
      %v104 = vld [vmem:[%s76 + $0xd8] sm:$0xff]
      %v105 = vld [vmem:[%s76 + $0xe0] sm:$0xff]
      %v106 = vld [vmem:[%s76 + $0xe8] sm:$0xff]
      %v107 = vld [vmem:[%s76 + $0xf0] sm:$0xff]
      %v108 = vld [vmem:[%s76 + $0xf8] sm:$0xff]
      %s109 = smul.addr %s74, 4
      %s110 = scalar_lea.vmem [#allocation8], %s109
      %v111 = vld [vmem:[%s110] sm:$0xff]
      %v112 = vld [vmem:[%s110 + $0x8] sm:$0xff]
      %v113 = vld [vmem:[%s110 + $0x10] sm:$0xff]
      %v114 = vld [vmem:[%s110 + $0x18] sm:$0xff]
      %v115 = vld [vmem:[%s110 + $0x20] sm:$0xff]
      %v116 = vld [vmem:[%s110 + $0x28] sm:$0xff]
      %v117 = vld [vmem:[%s110 + $0x30] sm:$0xff]
      %v118 = vld [vmem:[%s110 + $0x38] sm:$0xff]
      %v119 = vld [vmem:[%s110 + $0x40] sm:$0xff]
      %v120 = vld [vmem:[%s110 + $0x48] sm:$0xff]
      %v121 = vld [vmem:[%s110 + $0x50] sm:$0xff]
      %v122 = vld [vmem:[%s110 + $0x58] sm:$0xff]
      %v123 = vld [vmem:[%s110 + $0x60] sm:$0xff]
      %v124 = vld [vmem:[%s110 + $0x68] sm:$0xff]
      %v125 = vld [vmem:[%s110 + $0x70] sm:$0xff]
      %v126 = vld [vmem:[%s110 + $0x78] sm:$0xff]
      %v127 = vld [vmem:[%s110 + $0x80] sm:$0xff]
      %v128 = vld [vmem:[%s110 + $0x88] sm:$0xff]
      %v129 = vld [vmem:[%s110 + $0x90] sm:$0xff]
      %v130 = vld [vmem:[%s110 + $0x98] sm:$0xff]
      %v131 = vld [vmem:[%s110 + $0xa0] sm:$0xff]
      %v132 = vld [vmem:[%s110 + $0xa8] sm:$0xff]
      %v133 = vld [vmem:[%s110 + $0xb0] sm:$0xff]
      %v134 = vld [vmem:[%s110 + $0xb8] sm:$0xff]
      %v135 = vld [vmem:[%s110 + $0xc0] sm:$0xff]
      %v136 = vld [vmem:[%s110 + $0xc8] sm:$0xff]
      %v137 = vld [vmem:[%s110 + $0xd0] sm:$0xff]
      %v138 = vld [vmem:[%s110 + $0xd8] sm:$0xff]
      %v139 = vld [vmem:[%s110 + $0xe0] sm:$0xff]
      %v140 = vld [vmem:[%s110 + $0xe8] sm:$0xff]
      %v141 = vld [vmem:[%s110 + $0xf0] sm:$0xff]
      %v142 = vld [vmem:[%s110 + $0xf8] sm:$0xff]
      %s143 = smul.u32 %s69, 4
      %s144 = scalar_lea.vmem %s3, %s143
      %v145 = vld [vmem:[%s144] sm:$0xf]
      %v146 = vld [vmem:[#allocation2] sm:$0xf]
      %v147 = vld [vmem:[#allocation2 + $0x4] sm:$0xf]
      %v148 = vld [vmem:[#allocation2 + $0x8] sm:$0xf]
      %v149 = vld [vmem:[#allocation2 + $0xc] sm:$0xf]
      %v150 = vld [vmem:[#allocation2 + $0x10] sm:$0xf]
      %v151 = vld [vmem:[#allocation2 + $0x14] sm:$0xf]
      %v152 = vld [vmem:[#allocation2 + $0x18] sm:$0xf]
      %v153 = vld [vmem:[#allocation2 + $0x1c] sm:$0xf]
      %v155 = vlaneseq
      %v156 = vshrl.u32 %v155, 7
      %v157 = vsub.s32 0, %v156
      %v158 = vrot.slane %v145, %v157
      %v159 = vlaneseq
      %v160 = vshrl.u32 %v159, 7
      %v161 = vsub.s32 1, %v160
      %v162 = vrot.slane %v145, %v161
      %v163 = vlaneseq
      %v164 = vshrl.u32 %v163, 7
      %v165 = vsub.s32 2, %v164
      %v166 = vrot.slane %v145, %v165
      %v167 = vlaneseq
      %v168 = vshrl.u32 %v167, 7
      %v169 = vsub.s32 3, %v168
      %v170 = vrot.slane %v145, %v169
      %v183 = vunpack.c.l.b16 %v146
      %v184 = vunpack.c.l.b16 %v147
      %v185 = vunpack.c.l.b16 %v148
      %v186 = vunpack.c.l.b16 %v149
      %v187 = vunpack.c.l.b16 %v150
      %v188 = vunpack.c.l.b16 %v151
      %v189 = vunpack.c.l.b16 %v152
      %v190 = vunpack.c.l.b16 %v153
      %v191 = vpack.c.b16 %v184, %v183
      %v192 = vpack.c.b16 %v186, %v185
      %v193 = vpack.c.b16 %v188, %v187
      %v194 = vpack.c.b16 %v190, %v189
      %v231 = vunpack.c.l.b16 %v77
      %v232 = vunpack.c.h.b16 %v77
      %v233 = vunpack.c.l.b16 %v78
      %v234 = vunpack.c.h.b16 %v78
      %v235 = vunpack.c.l.b16 %v79
      %v236 = vunpack.c.h.b16 %v79
      %v237 = vunpack.c.l.b16 %v80
      %v238 = vunpack.c.h.b16 %v80
      %v239 = vunpack.c.l.b16 %v81
      %v240 = vunpack.c.h.b16 %v81
      %v241 = vunpack.c.l.b16 %v82
      %v242 = vunpack.c.h.b16 %v82
      %v243 = vunpack.c.l.b16 %v83
      %v244 = vunpack.c.h.b16 %v83
      %v245 = vunpack.c.l.b16 %v84
      %v246 = vunpack.c.h.b16 %v84
      %v247 = vunpack.c.l.b16 %v85
      %v248 = vunpack.c.h.b16 %v85
      %v249 = vunpack.c.l.b16 %v86
      %v250 = vunpack.c.h.b16 %v86
      %v251 = vunpack.c.l.b16 %v87
      %v252 = vunpack.c.h.b16 %v87
      %v253 = vunpack.c.l.b16 %v88
      %v254 = vunpack.c.h.b16 %v88
      %v255 = vunpack.c.l.b16 %v89
      %v256 = vunpack.c.h.b16 %v89
      %v257 = vunpack.c.l.b16 %v90
      %v258 = vunpack.c.h.b16 %v90
      %v259 = vunpack.c.l.b16 %v91
      %v260 = vunpack.c.h.b16 %v91
      %v261 = vunpack.c.l.b16 %v92
      %v262 = vunpack.c.h.b16 %v92
      %v263 = vunpack.c.l.b16 %v93
      %v264 = vunpack.c.h.b16 %v93
      %v265 = vunpack.c.l.b16 %v94
      %v266 = vunpack.c.h.b16 %v94
      %v267 = vunpack.c.l.b16 %v95
      %v268 = vunpack.c.h.b16 %v95
      %v269 = vunpack.c.l.b16 %v96
      %v270 = vunpack.c.h.b16 %v96
      %v271 = vunpack.c.l.b16 %v97
      %v272 = vunpack.c.h.b16 %v97
      %v273 = vunpack.c.l.b16 %v98
      %v274 = vunpack.c.h.b16 %v98
      %v275 = vunpack.c.l.b16 %v99
      %v276 = vunpack.c.h.b16 %v99
      %v277 = vunpack.c.l.b16 %v100
      %v278 = vunpack.c.h.b16 %v100
      %v279 = vunpack.c.l.b16 %v101
      %v280 = vunpack.c.h.b16 %v101
      %v281 = vunpack.c.l.b16 %v102
      %v282 = vunpack.c.h.b16 %v102
      %v283 = vunpack.c.l.b16 %v103
      %v284 = vunpack.c.h.b16 %v103
      %v285 = vunpack.c.l.b16 %v104
      %v286 = vunpack.c.h.b16 %v104
      %v287 = vunpack.c.l.b16 %v105
      %v288 = vunpack.c.h.b16 %v105
      %v289 = vunpack.c.l.b16 %v106
      %v290 = vunpack.c.h.b16 %v106
      %v291 = vunpack.c.l.b16 %v107
      %v292 = vunpack.c.h.b16 %v107
      %v293 = vunpack.c.l.b16 %v108
      %v294 = vunpack.c.h.b16 %v108
      %v295 = vpack.c.b16 %v235, %v231
      %v296 = vpack.c.b16 %v236, %v232
      %v297 = vpack.c.b16 %v237, %v233
      %v298 = vpack.c.b16 %v238, %v234
      %v299 = vpack.c.b16 %v243, %v239
      %v300 = vpack.c.b16 %v244, %v240
      %v301 = vpack.c.b16 %v245, %v241
      %v302 = vpack.c.b16 %v246, %v242
      %v303 = vpack.c.b16 %v251, %v247
      %v304 = vpack.c.b16 %v252, %v248
      %v305 = vpack.c.b16 %v253, %v249
      %v306 = vpack.c.b16 %v254, %v250
      %v307 = vpack.c.b16 %v259, %v255
      %v308 = vpack.c.b16 %v260, %v256
      %v309 = vpack.c.b16 %v261, %v257
      %v310 = vpack.c.b16 %v262, %v258
      %v311 = vpack.c.b16 %v267, %v263
      %v312 = vpack.c.b16 %v268, %v264
      %v313 = vpack.c.b16 %v269, %v265
      %v314 = vpack.c.b16 %v270, %v266
      %v315 = vpack.c.b16 %v275, %v271
      %v316 = vpack.c.b16 %v276, %v272
      %v317 = vpack.c.b16 %v277, %v273
      %v318 = vpack.c.b16 %v278, %v274
      %v319 = vpack.c.b16 %v283, %v279
      %v320 = vpack.c.b16 %v284, %v280
      %v321 = vpack.c.b16 %v285, %v281
      %v322 = vpack.c.b16 %v286, %v282
      %v323 = vpack.c.b16 %v291, %v287
      %v324 = vpack.c.b16 %v292, %v288
      %v325 = vpack.c.b16 %v293, %v289
      %v326 = vpack.c.b16 %v294, %v290
      %359 = vmatprep.subr.bf16.mxu0 %v296
      %360 = vmatpush1.bf16.msra.mxu0 %v295
      %361 = vmatprep.subr.bf16.mxu0 %v300
      %362 = vmatpush1.bf16.msra.mxu0 %v299
      %363 = vmatprep.subr.bf16.mxu0 %v304
      %364 = vmatpush1.bf16.msra.mxu0 %v303
      %365 = vmatprep.subr.bf16.mxu0 %v308
      %366 = vmatpush1.bf16.msra.mxu0 %v307
      %367 = vmatprep.subr.bf16.mxu0 %v312
      %368 = vmatpush1.bf16.msra.mxu0 %v311
      %369 = vmatprep.subr.bf16.mxu0 %v316
      %370 = vmatpush1.bf16.msra.mxu0 %v315
      %371 = vmatprep.subr.bf16.mxu0 %v320
      %372 = vmatpush1.bf16.msra.mxu0 %v319
      %373 = vmatprep.subr.bf16.mxu0 %v324
      %374 = vmatpush1.bf16.msra.mxu0 %v323
      %375 = vmatprep.subr.bf16.mxu0 0
      %376 = vmatpush1.bf16.msra.mxu0 0
      %377 = vmatprep.subr.bf16.mxu0 0
      %378 = vmatpush1.bf16.msra.mxu0 0
      %379 = vmatprep.subr.bf16.mxu0 0
      %380 = vmatpush1.bf16.msra.mxu0 0
      %381 = vmatprep.subr.bf16.mxu0 0
      %382 = vmatpush1.bf16.msra.mxu0 0
      %383 = vmatprep.subr.bf16.mxu0 0
      %384 = vmatpush1.bf16.msra.mxu0 0
      %385 = vmatprep.subr.bf16.mxu0 0
      %386 = vmatpush1.bf16.msra.mxu0 0
      %387 = vmatprep.subr.bf16.mxu0 0
      %388 = vmatpush1.bf16.msra.mxu0 0
      %389 = vmatprep.subr.bf16.mxu0 0
      %390 = vmatpush1.bf16.msra.mxu0 0
      %391 = vmatprep.mubr.bf16.mxu0 0
      %392 = vmatmul.mubr.bf16.gmra.mrb[0].mxu0 %v191
      %v393 = vpop.f32.mrb[0].mxu0
      %v394 = vadd.f32 %v158, %v393
      %v395 = vpop.f32.mrb[0].mxu0
      %v396 = vadd.f32 %v162, %v395
      %v397 = vpop.f32.mrb[0].mxu0
      %v398 = vadd.f32 %v158, %v397
      %v399 = vpop.f32.mrb[0].mxu0
      %v400 = vadd.f32 %v162, %v399
      %401 = vmatprep.mubr.bf16.mxu0 0
      %402 = vmatmul.mubr.bf16.gmra.mrb[0].mxu0 %v192
      %v403 = vpop.f32.mrb[0].mxu0
      %v404 = vadd.f32 %v158, %v403
      %v405 = vpop.f32.mrb[0].mxu0
      %v406 = vadd.f32 %v162, %v405
      %v407 = vpop.f32.mrb[0].mxu0
      %v408 = vadd.f32 %v158, %v407
      %v409 = vpop.f32.mrb[0].mxu0
      %v410 = vadd.f32 %v162, %v409
      %411 = vmatprep.mubr.bf16.mxu0 0
      %412 = vmatmul.mubr.bf16.gmra.mrb[0].mxu0 %v193
      %v413 = vpop.f32.mrb[0].mxu0
      %v414 = vadd.f32 %v158, %v413
      %v415 = vpop.f32.mrb[0].mxu0
      %v416 = vadd.f32 %v162, %v415
      %v417 = vpop.f32.mrb[0].mxu0
      %v418 = vadd.f32 %v158, %v417
      %v419 = vpop.f32.mrb[0].mxu0
      %v420 = vadd.f32 %v162, %v419
      %421 = vmatprep.mubr.bf16.mxu0 0
      %422 = vmatmul.mubr.bf16.gmra.mrb[0].mxu0 %v194
      %v423 = vpop.f32.mrb[0].mxu0
      %v424 = vadd.f32 %v158, %v423
      %v425 = vpop.f32.mrb[0].mxu0
      %v426 = vadd.f32 %v162, %v425
      %v427 = vpop.f32.mrb[0].mxu0
      %v428 = vadd.f32 %v158, %v427
      %v429 = vpop.f32.mrb[0].mxu0
      %v430 = vadd.f32 %v162, %v429
      %431 = vdwg.mxu0
      %432 = vmatprep.subr.bf16.mxu0 %v298
      %433 = vmatpush1.bf16.msra.mxu0 %v297
      %434 = vmatprep.subr.bf16.mxu0 %v302
      %435 = vmatpush1.bf16.msra.mxu0 %v301
      %436 = vmatprep.subr.bf16.mxu0 %v306
      %437 = vmatpush1.bf16.msra.mxu0 %v305
      %438 = vmatprep.subr.bf16.mxu0 %v310
      %439 = vmatpush1.bf16.msra.mxu0 %v309
      %440 = vmatprep.subr.bf16.mxu0 %v314
      %441 = vmatpush1.bf16.msra.mxu0 %v313
      %442 = vmatprep.subr.bf16.mxu0 %v318
      %443 = vmatpush1.bf16.msra.mxu0 %v317
      %444 = vmatprep.subr.bf16.mxu0 %v322
      %445 = vmatpush1.bf16.msra.mxu0 %v321
      %446 = vmatprep.subr.bf16.mxu0 %v326
      %447 = vmatpush1.bf16.msra.mxu0 %v325
      %448 = vmatprep.subr.bf16.mxu0 0
      %449 = vmatpush1.bf16.msra.mxu0 0
      %450 = vmatprep.subr.bf16.mxu0 0
      %451 = vmatpush1.bf16.msra.mxu0 0
      %452 = vmatprep.subr.bf16.mxu0 0
      %453 = vmatpush1.bf16.msra.mxu0 0
      %454 = vmatprep.subr.bf16.mxu0 0
      %455 = vmatpush1.bf16.msra.mxu0 0
      %456 = vmatprep.subr.bf16.mxu0 0
      %457 = vmatpush1.bf16.msra.mxu0 0
      %458 = vmatprep.subr.bf16.mxu0 0
      %459 = vmatpush1.bf16.msra.mxu0 0
      %460 = vmatprep.subr.bf16.mxu0 0
      %461 = vmatpush1.bf16.msra.mxu0 0
      %462 = vmatprep.subr.bf16.mxu0 0
      %463 = vmatpush1.bf16.msra.mxu0 0
      %464 = vmatprep.mubr.bf16.mxu0 0
      %465 = vmatmul.mubr.bf16.gmra.mrb[0].mxu0 %v191
      %v466 = vpop.f32.mrb[0].mxu0
      %v467 = vadd.f32 %v166, %v466
      %v468 = vpop.f32.mrb[0].mxu0
      %v469 = vadd.f32 %v170, %v468
      %v470 = vpop.f32.mrb[0].mxu0
      %v471 = vadd.f32 %v166, %v470
      %v472 = vpop.f32.mrb[0].mxu0
      %v473 = vadd.f32 %v170, %v472
      %474 = vmatprep.mubr.bf16.mxu0 0
      %475 = vmatmul.mubr.bf16.gmra.mrb[0].mxu0 %v192
      %v476 = vpop.f32.mrb[0].mxu0
      %v477 = vadd.f32 %v166, %v476
      %v478 = vpop.f32.mrb[0].mxu0
      %v479 = vadd.f32 %v170, %v478
      %v480 = vpop.f32.mrb[0].mxu0
      %v481 = vadd.f32 %v166, %v480
      %v482 = vpop.f32.mrb[0].mxu0
      %v483 = vadd.f32 %v170, %v482
      %484 = vmatprep.mubr.bf16.mxu0 0
      %485 = vmatmul.mubr.bf16.gmra.mrb[0].mxu0 %v193
      %v486 = vpop.f32.mrb[0].mxu0
      %v487 = vadd.f32 %v166, %v486
      %v488 = vpop.f32.mrb[0].mxu0
      %v489 = vadd.f32 %v170, %v488
      %v490 = vpop.f32.mrb[0].mxu0
      %v491 = vadd.f32 %v166, %v490
      %v492 = vpop.f32.mrb[0].mxu0
      %v493 = vadd.f32 %v170, %v492
      %494 = vmatprep.mubr.bf16.mxu0 0
      %495 = vmatmul.mubr.bf16.gmra.mrb[0].mxu0 %v194
      %v496 = vpop.f32.mrb[0].mxu0
      %v497 = vadd.f32 %v166, %v496
      %v498 = vpop.f32.mrb[0].mxu0
      %v499 = vadd.f32 %v170, %v498
      %v500 = vpop.f32.mrb[0].mxu0
      %v501 = vadd.f32 %v166, %v500
      %v502 = vpop.f32.mrb[0].mxu0
      %v503 = vadd.f32 %v170, %v502
      %504 = vdwg.mxu0
      %505 = vst [vmem:[#allocation3] sm:$0xff] %v394
      %506 = vst [vmem:[#allocation3 + $0x8] sm:$0xff] %v396
      %507 = vst [vmem:[#allocation3 + $0x10] sm:$0xff] %v467
      %508 = vst [vmem:[#allocation3 + $0x18] sm:$0xff] %v469
      %509 = vst [vmem:[#allocation3 + $0x20] sm:$0xff] %v398
      %510 = vst [vmem:[#allocation3 + $0x28] sm:$0xff] %v400
      %511 = vst [vmem:[#allocation3 + $0x30] sm:$0xff] %v471
      %512 = vst [vmem:[#allocation3 + $0x38] sm:$0xff] %v473
      %513 = vst [vmem:[#allocation3 + $0x40] sm:$0xff] %v404
      %514 = vst [vmem:[#allocation3 + $0x48] sm:$0xff] %v406
      %515 = vst [vmem:[#allocation3 + $0x50] sm:$0xff] %v477
      %516 = vst [vmem:[#allocation3 + $0x58] sm:$0xff] %v479
      %517 = vst [vmem:[#allocation3 + $0x60] sm:$0xff] %v408
      %518 = vst [vmem:[#allocation3 + $0x68] sm:$0xff] %v410
      %519 = vst [vmem:[#allocation3 + $0x70] sm:$0xff] %v481
      %520 = vst [vmem:[#allocation3 + $0x78] sm:$0xff] %v483
      %521 = vst [vmem:[#allocation3 + $0x80] sm:$0xff] %v414
      %522 = vst [vmem:[#allocation3 + $0x88] sm:$0xff] %v416
      %523 = vst [vmem:[#allocation3 + $0x90] sm:$0xff] %v487
      %524 = vst [vmem:[#allocation3 + $0x98] sm:$0xff] %v489
      %525 = vst [vmem:[#allocation3 + $0xa0] sm:$0xff] %v418
      %526 = vst [vmem:[#allocation3 + $0xa8] sm:$0xff] %v420
      %527 = vst [vmem:[#allocation3 + $0xb0] sm:$0xff] %v491
      %528 = vst [vmem:[#allocation3 + $0xb8] sm:$0xff] %v493
      %529 = vst [vmem:[#allocation3 + $0xc0] sm:$0xff] %v424
      %530 = vst [vmem:[#allocation3 + $0xc8] sm:$0xff] %v426
      %531 = vst [vmem:[#allocation3 + $0xd0] sm:$0xff] %v497
      %532 = vst [vmem:[#allocation3 + $0xd8] sm:$0xff] %v499
      %533 = vst [vmem:[#allocation3 + $0xe0] sm:$0xff] %v428
      %534 = vst [vmem:[#allocation3 + $0xe8] sm:$0xff] %v430
      %535 = vst [vmem:[#allocation3 + $0xf0] sm:$0xff] %v501
      %536 = vst [vmem:[#allocation3 + $0xf8] sm:$0xff] %v503
      %537 = vst [vmem:[#allocation4] sm:$0xff] 0.0
      %538 = vst [vmem:[#allocation5] sm:$0xff] 0.0
      %v539 = vld [vmem:[#allocation3] sm:$0xff]
      %v540 = vld [vmem:[#allocation3 + $0x8] sm:$0xff]
      %v541 = vld [vmem:[#allocation3 + $0x10] sm:$0xff]
      %v542 = vld [vmem:[#allocation3 + $0x18] sm:$0xff]
      %v543 = vld [vmem:[#allocation4] sm:$0xff]
      %v544 = vpack.c.bf16 %v543, %v543
      %v577 = vunpack.c.l.b16 %v111
      %v578 = vunpack.c.h.b16 %v111
      %v579 = vunpack.c.l.b16 %v112
      %v580 = vunpack.c.h.b16 %v112
      %v581 = vunpack.c.l.b16 %v113
      %v582 = vunpack.c.h.b16 %v113
      %v583 = vunpack.c.l.b16 %v114
      %v584 = vunpack.c.h.b16 %v114
      %v585 = vunpack.c.l.b16 %v115
      %v586 = vunpack.c.h.b16 %v115
      %v587 = vunpack.c.l.b16 %v116
      %v588 = vunpack.c.h.b16 %v116
      %v589 = vunpack.c.l.b16 %v117
      %v590 = vunpack.c.h.b16 %v117
      %v591 = vunpack.c.l.b16 %v118
      %v592 = vunpack.c.h.b16 %v118
      %v593 = vunpack.c.l.b16 %v119
      %v594 = vunpack.c.h.b16 %v119
      %v595 = vunpack.c.l.b16 %v120
      %v596 = vunpack.c.h.b16 %v120
      %v597 = vunpack.c.l.b16 %v121
      %v598 = vunpack.c.h.b16 %v121
      %v599 = vunpack.c.l.b16 %v122
      %v600 = vunpack.c.h.b16 %v122
      %v601 = vunpack.c.l.b16 %v123
      %v602 = vunpack.c.h.b16 %v123
      %v603 = vunpack.c.l.b16 %v124
      %v604 = vunpack.c.h.b16 %v124
      %v605 = vunpack.c.l.b16 %v125
      %v606 = vunpack.c.h.b16 %v125
      %v607 = vunpack.c.l.b16 %v126
      %v608 = vunpack.c.h.b16 %v126
      %v609 = vunpack.c.l.b16 %v127
      %v610 = vunpack.c.h.b16 %v127
      %v611 = vunpack.c.l.b16 %v128
      %v612 = vunpack.c.h.b16 %v128
      %v613 = vunpack.c.l.b16 %v129
      %v614 = vunpack.c.h.b16 %v129
      %v615 = vunpack.c.l.b16 %v130
      %v616 = vunpack.c.h.b16 %v130
      %v617 = vunpack.c.l.b16 %v131
      %v618 = vunpack.c.h.b16 %v131
      %v619 = vunpack.c.l.b16 %v132
      %v620 = vunpack.c.h.b16 %v132
      %v621 = vunpack.c.l.b16 %v133
      %v622 = vunpack.c.h.b16 %v133
      %v623 = vunpack.c.l.b16 %v134
      %v624 = vunpack.c.h.b16 %v134
      %v625 = vunpack.c.l.b16 %v135
      %v626 = vunpack.c.h.b16 %v135
      %v627 = vunpack.c.l.b16 %v136
      %v628 = vunpack.c.h.b16 %v136
      %v629 = vunpack.c.l.b16 %v137
      %v630 = vunpack.c.h.b16 %v137
      %v631 = vunpack.c.l.b16 %v138
      %v632 = vunpack.c.h.b16 %v138
      %v633 = vunpack.c.l.b16 %v139
      %v634 = vunpack.c.h.b16 %v139
      %v635 = vunpack.c.l.b16 %v140
      %v636 = vunpack.c.h.b16 %v140
      %v637 = vunpack.c.l.b16 %v141
      %v638 = vunpack.c.h.b16 %v141
      %v639 = vunpack.c.l.b16 %v142
      %v640 = vunpack.c.h.b16 %v142
      %v641 = vpack.c.b16 %v581, %v577
      %v642 = vpack.c.b16 %v582, %v578
      %v643 = vpack.c.b16 %v583, %v579
      %v644 = vpack.c.b16 %v584, %v580
      %v645 = vpack.c.b16 %v589, %v585
      %v646 = vpack.c.b16 %v590, %v586
      %v647 = vpack.c.b16 %v591, %v587
      %v648 = vpack.c.b16 %v592, %v588
      %v649 = vpack.c.b16 %v597, %v593
      %v650 = vpack.c.b16 %v598, %v594
      %v651 = vpack.c.b16 %v599, %v595
      %v652 = vpack.c.b16 %v600, %v596
      %v653 = vpack.c.b16 %v605, %v601
      %v654 = vpack.c.b16 %v606, %v602
      %v655 = vpack.c.b16 %v607, %v603
      %v656 = vpack.c.b16 %v608, %v604
      %v657 = vpack.c.b16 %v613, %v609
      %v658 = vpack.c.b16 %v614, %v610
      %v659 = vpack.c.b16 %v615, %v611
      %v660 = vpack.c.b16 %v616, %v612
      %v661 = vpack.c.b16 %v621, %v617
      %v662 = vpack.c.b16 %v622, %v618
      %v663 = vpack.c.b16 %v623, %v619
      %v664 = vpack.c.b16 %v624, %v620
      %v665 = vpack.c.b16 %v629, %v625
      %v666 = vpack.c.b16 %v630, %v626
      %v667 = vpack.c.b16 %v631, %v627
      %v668 = vpack.c.b16 %v632, %v628
      %v669 = vpack.c.b16 %v637, %v633
      %v670 = vpack.c.b16 %v638, %v634
      %v671 = vpack.c.b16 %v639, %v635
      %v672 = vpack.c.b16 %v640, %v636
      %705 = vmatprep.subr.bf16.mxu0 %v642
      %706 = vmatpush1.bf16.msra.mxu0 %v641
      %707 = vmatprep.subr.bf16.mxu0 %v646
      %708 = vmatpush1.bf16.msra.mxu0 %v645
      %709 = vmatprep.subr.bf16.mxu0 %v650
      %710 = vmatpush1.bf16.msra.mxu0 %v649
      %711 = vmatprep.subr.bf16.mxu0 %v654
      %712 = vmatpush1.bf16.msra.mxu0 %v653
      %713 = vmatprep.subr.bf16.mxu0 %v658
      %714 = vmatpush1.bf16.msra.mxu0 %v657
      %715 = vmatprep.subr.bf16.mxu0 %v662
      %716 = vmatpush1.bf16.msra.mxu0 %v661
      %717 = vmatprep.subr.bf16.mxu0 %v666
      %718 = vmatpush1.bf16.msra.mxu0 %v665
      %719 = vmatprep.subr.bf16.mxu0 %v670
      %720 = vmatpush1.bf16.msra.mxu0 %v669
      %721 = vmatprep.subr.bf16.mxu0 0
      %722 = vmatpush1.bf16.msra.mxu0 0
      %723 = vmatprep.subr.bf16.mxu0 0
      %724 = vmatpush1.bf16.msra.mxu0 0
      %725 = vmatprep.subr.bf16.mxu0 0
      %726 = vmatpush1.bf16.msra.mxu0 0
      %727 = vmatprep.subr.bf16.mxu0 0
      %728 = vmatpush1.bf16.msra.mxu0 0
      %729 = vmatprep.subr.bf16.mxu0 0
      %730 = vmatpush1.bf16.msra.mxu0 0
      %731 = vmatprep.subr.bf16.mxu0 0
      %732 = vmatpush1.bf16.msra.mxu0 0
      %733 = vmatprep.subr.bf16.mxu0 0
      %734 = vmatpush1.bf16.msra.mxu0 0
      %735 = vmatprep.subr.bf16.mxu0 0
      %736 = vmatpush1.bf16.msra.mxu0 0
      %737 = vmatprep.mubr.bf16.mxu0 0
      %738 = vmatmul.mubr.bf16.gmra.mrb[0].mxu0 %v544
      %v739 = vpop.f32.mrb[0].mxu0
      %v740 = vadd.f32 0.0, %v739
      %v741 = vpop.f32.mrb[0].mxu0
      %v742 = vadd.f32 0.0, %v741
      %v743 = vpop.f32.mrb[0].mxu0
      %v744 = vpop.f32.mrb[0].mxu0
      %745 = vdwg.mxu0
      %746 = vmatprep.subr.bf16.mxu0 %v644
      %747 = vmatpush1.bf16.msra.mxu0 %v643
      %748 = vmatprep.subr.bf16.mxu0 %v648
      %749 = vmatpush1.bf16.msra.mxu0 %v647
      %750 = vmatprep.subr.bf16.mxu0 %v652
      %751 = vmatpush1.bf16.msra.mxu0 %v651
      %752 = vmatprep.subr.bf16.mxu0 %v656
      %753 = vmatpush1.bf16.msra.mxu0 %v655
      %754 = vmatprep.subr.bf16.mxu0 %v660
      %755 = vmatpush1.bf16.msra.mxu0 %v659
      %756 = vmatprep.subr.bf16.mxu0 %v664
      %757 = vmatpush1.bf16.msra.mxu0 %v663
      %758 = vmatprep.subr.bf16.mxu0 %v668
      %759 = vmatpush1.bf16.msra.mxu0 %v667
      %760 = vmatprep.subr.bf16.mxu0 %v672
      %761 = vmatpush1.bf16.msra.mxu0 %v671
      %762 = vmatprep.subr.bf16.mxu0 0
      %763 = vmatpush1.bf16.msra.mxu0 0
      %764 = vmatprep.subr.bf16.mxu0 0
      %765 = vmatpush1.bf16.msra.mxu0 0
      %766 = vmatprep.subr.bf16.mxu0 0
      %767 = vmatpush1.bf16.msra.mxu0 0
      %768 = vmatprep.subr.bf16.mxu0 0
      %769 = vmatpush1.bf16.msra.mxu0 0
      %770 = vmatprep.subr.bf16.mxu0 0
      %771 = vmatpush1.bf16.msra.mxu0 0
      %772 = vmatprep.subr.bf16.mxu0 0
      %773 = vmatpush1.bf16.msra.mxu0 0
      %774 = vmatprep.subr.bf16.mxu0 0
      %775 = vmatpush1.bf16.msra.mxu0 0
      %776 = vmatprep.subr.bf16.mxu0 0
      %777 = vmatpush1.bf16.msra.mxu0 0
      %778 = vmatprep.mubr.bf16.mxu0 0
      %779 = vmatmul.mubr.bf16.gmra.mrb[0].mxu0 %v544
      %v780 = vpop.f32.mrb[0].mxu0
      %v781 = vadd.f32 0.0, %v780
      %v782 = vpop.f32.mrb[0].mxu0
      %v783 = vadd.f32 0.0, %v782
      %v784 = vpop.f32.mrb[0].mxu0
      %v785 = vpop.f32.mrb[0].mxu0
      %786 = vdwg.mxu0
      %v787 = vadd.f32 %v539, %v740
      %v788 = vadd.f32 %v540, %v742
      %v789 = vadd.f32 %v541, %v781
      %v790 = vadd.f32 %v542, %v783
      %v791 = vxor.u32 %v787, 2147483648
      %v792 = vmul.f32 %v791, 1.442695
      %v793 = vpow.pop %v792
      %v794 = vadd.f32 %v793, 1.0
      %v795 = vrcp.pop %v794
      %v796 = vmul.f32 1.0, %v795
      %v797 = vxor.u32 %v788, 2147483648
      %v798 = vmul.f32 %v797, 1.442695
      %v799 = vpow.pop %v798
      %v800 = vadd.f32 %v799, 1.0
      %v801 = vrcp.pop %v800
      %v802 = vmul.f32 1.0, %v801
      %v803 = vtanh.pop %v789
      %v804 = vxor.u32 %v790, 2147483648
      %v805 = vmul.f32 %v804, 1.442695
      %v806 = vpow.pop %v805
      %v807 = vadd.f32 %v806, 1.0
      %v808 = vrcp.pop %v807
      %v809 = vmul.f32 1.0, %v808
      %v810 = vld [vmem:[#allocation5] sm:$0xff]
      %v811 = vmul.f32 %v802, %v810
      %v812 = vmul.f32 %v796, %v803
      %v813 = vadd.f32 %v811, %v812
      %v814 = vtanh.pop %v813
      %v815 = vmul.f32 %v809, %v814
      %816 = vst [vmem:[#allocation5] sm:$0xff] %v813
      %817 = vst [vmem:[#allocation4] sm:$0xff] %v815
      %v818 = vpack.c.bf16 %v815, %v815
      %819 = vst [vmem:[#allocation2] sm:$0xf] %v818
      %s820 = scalar_lea.vmem [#allocation3], 32
      %v821 = vld [vmem:[%s820] sm:$0xff]
      %v822 = vld [vmem:[%s820 + $0x8] sm:$0xff]
      %v823 = vld [vmem:[%s820 + $0x10] sm:$0xff]
      %v824 = vld [vmem:[%s820 + $0x18] sm:$0xff]
      %v825 = vld [vmem:[#allocation4] sm:$0xff]
      %v826 = vpack.c.bf16 %v825, %v825
      %827 = vmatprep.subr.bf16.mxu0 %v642
      %828 = vmatpush1.bf16.msra.mxu0 %v641
      %829 = vmatprep.subr.bf16.mxu0 %v646
      %830 = vmatpush1.bf16.msra.mxu0 %v645
      %831 = vmatprep.subr.bf16.mxu0 %v650
      %832 = vmatpush1.bf16.msra.mxu0 %v649
      %833 = vmatprep.subr.bf16.mxu0 %v654
      %834 = vmatpush1.bf16.msra.mxu0 %v653
      %835 = vmatprep.subr.bf16.mxu0 %v658
      %836 = vmatpush1.bf16.msra.mxu0 %v657
      %837 = vmatprep.subr.bf16.mxu0 %v662
      %838 = vmatpush1.bf16.msra.mxu0 %v661
      %839 = vmatprep.subr.bf16.mxu0 %v666
      %840 = vmatpush1.bf16.msra.mxu0 %v665
      %841 = vmatprep.subr.bf16.mxu0 %v670
      %842 = vmatpush1.bf16.msra.mxu0 %v669
      %843 = vmatprep.subr.bf16.mxu0 0
      %844 = vmatpush1.bf16.msra.mxu0 0
      %845 = vmatprep.subr.bf16.mxu0 0
      %846 = vmatpush1.bf16.msra.mxu0 0
      %847 = vmatprep.subr.bf16.mxu0 0
      %848 = vmatpush1.bf16.msra.mxu0 0
      %849 = vmatprep.subr.bf16.mxu0 0
      %850 = vmatpush1.bf16.msra.mxu0 0
      %851 = vmatprep.subr.bf16.mxu0 0
      %852 = vmatpush1.bf16.msra.mxu0 0
      %853 = vmatprep.subr.bf16.mxu0 0
      %854 = vmatpush1.bf16.msra.mxu0 0
      %855 = vmatprep.subr.bf16.mxu0 0
      %856 = vmatpush1.bf16.msra.mxu0 0
      %857 = vmatprep.subr.bf16.mxu0 0
      %858 = vmatpush1.bf16.msra.mxu0 0
      %859 = vmatprep.mubr.bf16.mxu0 0
      %860 = vmatmul.mubr.bf16.gmra.mrb[0].mxu0 %v826
      %v861 = vpop.f32.mrb[0].mxu0
      %v862 = vadd.f32 0.0, %v861
      %v863 = vpop.f32.mrb[0].mxu0
      %v864 = vadd.f32 0.0, %v863
      %v865 = vpop.f32.mrb[0].mxu0
      %v866 = vpop.f32.mrb[0].mxu0
      %867 = vdwg.mxu0
      %868 = vmatprep.subr.bf16.mxu0 %v644
      %869 = vmatpush1.bf16.msra.mxu0 %v643
      %870 = vmatprep.subr.bf16.mxu0 %v648
      %871 = vmatpush1.bf16.msra.mxu0 %v647
      %872 = vmatprep.subr.bf16.mxu0 %v652
      %873 = vmatpush1.bf16.msra.mxu0 %v651
      %874 = vmatprep.subr.bf16.mxu0 %v656
      %875 = vmatpush1.bf16.msra.mxu0 %v655
      %876 = vmatprep.subr.bf16.mxu0 %v660
      %877 = vmatpush1.bf16.msra.mxu0 %v659
      %878 = vmatprep.subr.bf16.mxu0 %v664
      %879 = vmatpush1.bf16.msra.mxu0 %v663
      %880 = vmatprep.subr.bf16.mxu0 %v668
      %881 = vmatpush1.bf16.msra.mxu0 %v667
      %882 = vmatprep.subr.bf16.mxu0 %v672
      %883 = vmatpush1.bf16.msra.mxu0 %v671
      %884 = vmatprep.subr.bf16.mxu0 0
      %885 = vmatpush1.bf16.msra.mxu0 0
      %886 = vmatprep.subr.bf16.mxu0 0
      %887 = vmatpush1.bf16.msra.mxu0 0
      %888 = vmatprep.subr.bf16.mxu0 0
      %889 = vmatpush1.bf16.msra.mxu0 0
      %890 = vmatprep.subr.bf16.mxu0 0
      %891 = vmatpush1.bf16.msra.mxu0 0
      %892 = vmatprep.subr.bf16.mxu0 0
      %893 = vmatpush1.bf16.msra.mxu0 0
      %894 = vmatprep.subr.bf16.mxu0 0
      %895 = vmatpush1.bf16.msra.mxu0 0
      %896 = vmatprep.subr.bf16.mxu0 0
      %897 = vmatpush1.bf16.msra.mxu0 0
      %898 = vmatprep.subr.bf16.mxu0 0
      %899 = vmatpush1.bf16.msra.mxu0 0
      %900 = vmatprep.mubr.bf16.mxu0 0
      %901 = vmatmul.mubr.bf16.gmra.mrb[0].mxu0 %v826
      %v902 = vpop.f32.mrb[0].mxu0
      %v903 = vadd.f32 0.0, %v902
      %v904 = vpop.f32.mrb[0].mxu0
      %v905 = vadd.f32 0.0, %v904
      %v906 = vpop.f32.mrb[0].mxu0
      %v907 = vpop.f32.mrb[0].mxu0
      %908 = vdwg.mxu0
      %v909 = vadd.f32 %v821, %v862
      %v910 = vadd.f32 %v822, %v864
      %v911 = vadd.f32 %v823, %v903
      %v912 = vadd.f32 %v824, %v905
      %v913 = vxor.u32 %v909, 2147483648
      %v914 = vmul.f32 %v913, 1.442695
      %v915 = vpow.pop %v914
      %v916 = vadd.f32 %v915, 1.0
      %v917 = vrcp.pop %v916
      %v918 = vmul.f32 1.0, %v917
      %v919 = vxor.u32 %v910, 2147483648
      %v920 = vmul.f32 %v919, 1.442695
      %v921 = vpow.pop %v920
      %v922 = vadd.f32 %v921, 1.0
      %v923 = vrcp.pop %v922
      %v924 = vmul.f32 1.0, %v923
      %v925 = vtanh.pop %v911
      %v926 = vxor.u32 %v912, 2147483648
      %v927 = vmul.f32 %v926, 1.442695
      %v928 = vpow.pop %v927
      %v929 = vadd.f32 %v928, 1.0
      %v930 = vrcp.pop %v929
      %v931 = vmul.f32 1.0, %v930
      %v932 = vld [vmem:[#allocation5] sm:$0xff]
      %v933 = vmul.f32 %v924, %v932
      %v934 = vmul.f32 %v918, %v925
      %v935 = vadd.f32 %v933, %v934
      %v936 = vtanh.pop %v935
      %v937 = vmul.f32 %v931, %v936
      %938 = vst [vmem:[#allocation5] sm:$0xff] %v935
      %939 = vst [vmem:[#allocation4] sm:$0xff] %v937
      %v940 = vpack.c.bf16 %v937, %v937
      %s941 = scalar_lea.vmem [#allocation2], 4
      %942 = vst [vmem:[%s941] sm:$0xf] %v940
      %s943 = scalar_lea.vmem [#allocation3], 64
      %v944 = vld [vmem:[%s943] sm:$0xff]
      %v945 = vld [vmem:[%s943 + $0x8] sm:$0xff]
      %v946 = vld [vmem:[%s943 + $0x10] sm:$0xff]
      %v947 = vld [vmem:[%s943 + $0x18] sm:$0xff]
      %v948 = vld [vmem:[#allocation4] sm:$0xff]
      %v949 = vpack.c.bf16 %v948, %v948
      %950 = vmatprep.subr.bf16.mxu0 %v642
      %951 = vmatpush1.bf16.msra.mxu0 %v641
      %952 = vmatprep.subr.bf16.mxu0 %v646
      %953 = vmatpush1.bf16.msra.mxu0 %v645
      %954 = vmatprep.subr.bf16.mxu0 %v650
      %955 = vmatpush1.bf16.msra.mxu0 %v649
      %956 = vmatprep.subr.bf16.mxu0 %v654
      %957 = vmatpush1.bf16.msra.mxu0 %v653
      %958 = vmatprep.subr.bf16.mxu0 %v658
      %959 = vmatpush1.bf16.msra.mxu0 %v657
      %960 = vmatprep.subr.bf16.mxu0 %v662
      %961 = vmatpush1.bf16.msra.mxu0 %v661
      %962 = vmatprep.subr.bf16.mxu0 %v666
      %963 = vmatpush1.bf16.msra.mxu0 %v665
      %964 = vmatprep.subr.bf16.mxu0 %v670
      %965 = vmatpush1.bf16.msra.mxu0 %v669
      %966 = vmatprep.subr.bf16.mxu0 0
      %967 = vmatpush1.bf16.msra.mxu0 0
      %968 = vmatprep.subr.bf16.mxu0 0
      %969 = vmatpush1.bf16.msra.mxu0 0
      %970 = vmatprep.subr.bf16.mxu0 0
      %971 = vmatpush1.bf16.msra.mxu0 0
      %972 = vmatprep.subr.bf16.mxu0 0
      %973 = vmatpush1.bf16.msra.mxu0 0
      %974 = vmatprep.subr.bf16.mxu0 0
      %975 = vmatpush1.bf16.msra.mxu0 0
      %976 = vmatprep.subr.bf16.mxu0 0
      %977 = vmatpush1.bf16.msra.mxu0 0
      %978 = vmatprep.subr.bf16.mxu0 0
      %979 = vmatpush1.bf16.msra.mxu0 0
      %980 = vmatprep.subr.bf16.mxu0 0
      %981 = vmatpush1.bf16.msra.mxu0 0
      %982 = vmatprep.mubr.bf16.mxu0 0
      %983 = vmatmul.mubr.bf16.gmra.mrb[0].mxu0 %v949
      %v984 = vpop.f32.mrb[0].mxu0
      %v985 = vadd.f32 0.0, %v984
      %v986 = vpop.f32.mrb[0].mxu0
      %v987 = vadd.f32 0.0, %v986
      %v988 = vpop.f32.mrb[0].mxu0
      %v989 = vpop.f32.mrb[0].mxu0
      %990 = vdwg.mxu0
      %991 = vmatprep.subr.bf16.mxu0 %v644
      %992 = vmatpush1.bf16.msra.mxu0 %v643
      %993 = vmatprep.subr.bf16.mxu0 %v648
      %994 = vmatpush1.bf16.msra.mxu0 %v647
      %995 = vmatprep.subr.bf16.mxu0 %v652
      %996 = vmatpush1.bf16.msra.mxu0 %v651
      %997 = vmatprep.subr.bf16.mxu0 %v656
      %998 = vmatpush1.bf16.msra.mxu0 %v655
      %999 = vmatprep.subr.bf16.mxu0 %v660
      %1000 = vmatpush1.bf16.msra.mxu0 %v659
      %1001 = vmatprep.subr.bf16.mxu0 %v664
      %1002 = vmatpush1.bf16.msra.mxu0 %v663
      %1003 = vmatprep.subr.bf16.mxu0 %v668
      %1004 = vmatpush1.bf16.msra.mxu0 %v667
      %1005 = vmatprep.subr.bf16.mxu0 %v672
      %1006 = vmatpush1.bf16.msra.mxu0 %v671
      %1007 = vmatprep.subr.bf16.mxu0 0
      %1008 = vmatpush1.bf16.msra.mxu0 0
      %1009 = vmatprep.subr.bf16.mxu0 0
      %1010 = vmatpush1.bf16.msra.mxu0 0
      %1011 = vmatprep.subr.bf16.mxu0 0
      %1012 = vmatpush1.bf16.msra.mxu0 0
      %1013 = vmatprep.subr.bf16.mxu0 0
      %1014 = vmatpush1.bf16.msra.mxu0 0
      %1015 = vmatprep.subr.bf16.mxu0 0
      %1016 = vmatpush1.bf16.msra.mxu0 0
      %1017 = vmatprep.subr.bf16.mxu0 0
      %1018 = vmatpush1.bf16.msra.mxu0 0
      %1019 = vmatprep.subr.bf16.mxu0 0
      %1020 = vmatpush1.bf16.msra.mxu0 0
      %1021 = vmatprep.subr.bf16.mxu0 0
      %1022 = vmatpush1.bf16.msra.mxu0 0
      %1023 = vmatprep.mubr.bf16.mxu0 0
      %1024 = vmatmul.mubr.bf16.gmra.mrb[0].mxu0 %v949
      %v1025 = vpop.f32.mrb[0].mxu0
      %v1026 = vadd.f32 0.0, %v1025
      %v1027 = vpop.f32.mrb[0].mxu0
      %v1028 = vadd.f32 0.0, %v1027
      %v1029 = vpop.f32.mrb[0].mxu0
      %v1030 = vpop.f32.mrb[0].mxu0
      %1031 = vdwg.mxu0
      %v1032 = vadd.f32 %v944, %v985
      %v1033 = vadd.f32 %v945, %v987
      %v1034 = vadd.f32 %v946, %v1026
      %v1035 = vadd.f32 %v947, %v1028
      %v1036 = vxor.u32 %v1032, 2147483648
      %v1037 = vmul.f32 %v1036, 1.442695
      %v1038 = vpow.pop %v1037
      %v1039 = vadd.f32 %v1038, 1.0
      %v1040 = vrcp.pop %v1039
      %v1041 = vmul.f32 1.0, %v1040
      %v1042 = vxor.u32 %v1033, 2147483648
      %v1043 = vmul.f32 %v1042, 1.442695
      %v1044 = vpow.pop %v1043
      %v1045 = vadd.f32 %v1044, 1.0
      %v1046 = vrcp.pop %v1045
      %v1047 = vmul.f32 1.0, %v1046
      %v1048 = vtanh.pop %v1034
      %v1049 = vxor.u32 %v1035, 2147483648
      %v1050 = vmul.f32 %v1049, 1.442695
      %v1051 = vpow.pop %v1050
      %v1052 = vadd.f32 %v1051, 1.0
      %v1053 = vrcp.pop %v1052
      %v1054 = vmul.f32 1.0, %v1053
      %v1055 = vld [vmem:[#allocation5] sm:$0xff]
      %v1056 = vmul.f32 %v1047, %v1055
      %v1057 = vmul.f32 %v1041, %v1048
      %v1058 = vadd.f32 %v1056, %v1057
      %v1059 = vtanh.pop %v1058
      %v1060 = vmul.f32 %v1054, %v1059
      %1061 = vst [vmem:[#allocation5] sm:$0xff] %v1058
      %1062 = vst [vmem:[#allocation4] sm:$0xff] %v1060
      %v1063 = vpack.c.bf16 %v1060, %v1060
      %s1064 = scalar_lea.vmem [#allocation2], 8
      %1065 = vst [vmem:[%s1064] sm:$0xf] %v1063
      %s1066 = scalar_lea.vmem [#allocation3], 96
      %v1067 = vld [vmem:[%s1066] sm:$0xff]
      %v1068 = vld [vmem:[%s1066 + $0x8] sm:$0xff]
      %v1069 = vld [vmem:[%s1066 + $0x10] sm:$0xff]
      %v1070 = vld [vmem:[%s1066 + $0x18] sm:$0xff]
      %v1071 = vld [vmem:[#allocation4] sm:$0xff]
      %v1072 = vpack.c.bf16 %v1071, %v1071
      %1073 = vmatprep.subr.bf16.mxu0 %v642
      %1074 = vmatpush1.bf16.msra.mxu0 %v641
      %1075 = vmatprep.subr.bf16.mxu0 %v646
      %1076 = vmatpush1.bf16.msra.mxu0 %v645
      %1077 = vmatprep.subr.bf16.mxu0 %v650
      %1078 = vmatpush1.bf16.msra.mxu0 %v649
      %1079 = vmatprep.subr.bf16.mxu0 %v654
      %1080 = vmatpush1.bf16.msra.mxu0 %v653
      %1081 = vmatprep.subr.bf16.mxu0 %v658
      %1082 = vmatpush1.bf16.msra.mxu0 %v657
      %1083 = vmatprep.subr.bf16.mxu0 %v662
      %1084 = vmatpush1.bf16.msra.mxu0 %v661
      %1085 = vmatprep.subr.bf16.mxu0 %v666
      %1086 = vmatpush1.bf16.msra.mxu0 %v665
      %1087 = vmatprep.subr.bf16.mxu0 %v670
      %1088 = vmatpush1.bf16.msra.mxu0 %v669
      %1089 = vmatprep.subr.bf16.mxu0 0
      %1090 = vmatpush1.bf16.msra.mxu0 0
      %1091 = vmatprep.subr.bf16.mxu0 0
      %1092 = vmatpush1.bf16.msra.mxu0 0
      %1093 = vmatprep.subr.bf16.mxu0 0
      %1094 = vmatpush1.bf16.msra.mxu0 0
      %1095 = vmatprep.subr.bf16.mxu0 0
      %1096 = vmatpush1.bf16.msra.mxu0 0
      %1097 = vmatprep.subr.bf16.mxu0 0
      %1098 = vmatpush1.bf16.msra.mxu0 0
      %1099 = vmatprep.subr.bf16.mxu0 0
      %1100 = vmatpush1.bf16.msra.mxu0 0
      %1101 = vmatprep.subr.bf16.mxu0 0
      %1102 = vmatpush1.bf16.msra.mxu0 0
      %1103 = vmatprep.subr.bf16.mxu0 0
      %1104 = vmatpush1.bf16.msra.mxu0 0
      %1105 = vmatprep.mubr.bf16.mxu0 0
      %1106 = vmatmul.mubr.bf16.gmra.mrb[0].mxu0 %v1072
      %v1107 = vpop.f32.mrb[0].mxu0
      %v1108 = vadd.f32 0.0, %v1107
      %v1109 = vpop.f32.mrb[0].mxu0
      %v1110 = vadd.f32 0.0, %v1109
      %v1111 = vpop.f32.mrb[0].mxu0
      %v1112 = vpop.f32.mrb[0].mxu0
      %1113 = vdwg.mxu0
      %1114 = vmatprep.subr.bf16.mxu0 %v644
      %1115 = vmatpush1.bf16.msra.mxu0 %v643
      %1116 = vmatprep.subr.bf16.mxu0 %v648
      %1117 = vmatpush1.bf16.msra.mxu0 %v647
      %1118 = vmatprep.subr.bf16.mxu0 %v652
      %1119 = vmatpush1.bf16.msra.mxu0 %v651
      %1120 = vmatprep.subr.bf16.mxu0 %v656
      %1121 = vmatpush1.bf16.msra.mxu0 %v655
      %1122 = vmatprep.subr.bf16.mxu0 %v660
      %1123 = vmatpush1.bf16.msra.mxu0 %v659
      %1124 = vmatprep.subr.bf16.mxu0 %v664
      %1125 = vmatpush1.bf16.msra.mxu0 %v663
      %1126 = vmatprep.subr.bf16.mxu0 %v668
      %1127 = vmatpush1.bf16.msra.mxu0 %v667
      %1128 = vmatprep.subr.bf16.mxu0 %v672
      %1129 = vmatpush1.bf16.msra.mxu0 %v671
      %1130 = vmatprep.subr.bf16.mxu0 0
      %1131 = vmatpush1.bf16.msra.mxu0 0
      %1132 = vmatprep.subr.bf16.mxu0 0
      %1133 = vmatpush1.bf16.msra.mxu0 0
      %1134 = vmatprep.subr.bf16.mxu0 0
      %1135 = vmatpush1.bf16.msra.mxu0 0
      %1136 = vmatprep.subr.bf16.mxu0 0
      %1137 = vmatpush1.bf16.msra.mxu0 0
      %1138 = vmatprep.subr.bf16.mxu0 0
      %1139 = vmatpush1.bf16.msra.mxu0 0
      %1140 = vmatprep.subr.bf16.mxu0 0
      %1141 = vmatpush1.bf16.msra.mxu0 0
      %1142 = vmatprep.subr.bf16.mxu0 0
      %1143 = vmatpush1.bf16.msra.mxu0 0
      %1144 = vmatprep.subr.bf16.mxu0 0
      %1145 = vmatpush1.bf16.msra.mxu0 0
      %1146 = vmatprep.mubr.bf16.mxu0 0
      %1147 = vmatmul.mubr.bf16.gmra.mrb[0].mxu0 %v1072
      %v1148 = vpop.f32.mrb[0].mxu0
      %v1149 = vadd.f32 0.0, %v1148
      %v1150 = vpop.f32.mrb[0].mxu0
      %v1151 = vadd.f32 0.0, %v1150
      %v1152 = vpop.f32.mrb[0].mxu0
      %v1153 = vpop.f32.mrb[0].mxu0
      %1154 = vdwg.mxu0
      %v1155 = vadd.f32 %v1067, %v1108
      %v1156 = vadd.f32 %v1068, %v1110
      %v1157 = vadd.f32 %v1069, %v1149
      %v1158 = vadd.f32 %v1070, %v1151
      %v1159 = vxor.u32 %v1155, 2147483648
      %v1160 = vmul.f32 %v1159, 1.442695
      %v1161 = vpow.pop %v1160
      %v1162 = vadd.f32 %v1161, 1.0
      %v1163 = vrcp.pop %v1162
      %v1164 = vmul.f32 1.0, %v1163
      %v1165 = vxor.u32 %v1156, 2147483648
      %v1166 = vmul.f32 %v1165, 1.442695
      %v1167 = vpow.pop %v1166
      %v1168 = vadd.f32 %v1167, 1.0
      %v1169 = vrcp.pop %v1168
      %v1170 = vmul.f32 1.0, %v1169
      %v1171 = vtanh.pop %v1157
      %v1172 = vxor.u32 %v1158, 2147483648
      %v1173 = vmul.f32 %v1172, 1.442695
      %v1174 = vpow.pop %v1173
      %v1175 = vadd.f32 %v1174, 1.0
      %v1176 = vrcp.pop %v1175
      %v1177 = vmul.f32 1.0, %v1176
      %v1178 = vld [vmem:[#allocation5] sm:$0xff]
      %v1179 = vmul.f32 %v1170, %v1178
      %v1180 = vmul.f32 %v1164, %v1171
      %v1181 = vadd.f32 %v1179, %v1180
      %v1182 = vtanh.pop %v1181
      %v1183 = vmul.f32 %v1177, %v1182
      %1184 = vst [vmem:[#allocation5] sm:$0xff] %v1181
      %1185 = vst [vmem:[#allocation4] sm:$0xff] %v1183
      %v1186 = vpack.c.bf16 %v1183, %v1183
      %s1187 = scalar_lea.vmem [#allocation2], 12
      %1188 = vst [vmem:[%s1187] sm:$0xf] %v1186
      %s1189 = scalar_lea.vmem [#allocation3], 128
      %v1190 = vld [vmem:[%s1189] sm:$0xff]
      %v1191 = vld [vmem:[%s1189 + $0x8] sm:$0xff]
      %v1192 = vld [vmem:[%s1189 + $0x10] sm:$0xff]
      %v1193 = vld [vmem:[%s1189 + $0x18] sm:$0xff]
      %v1194 = vld [vmem:[#allocation4] sm:$0xff]
      %v1195 = vpack.c.bf16 %v1194, %v1194
      %1196 = vmatprep.subr.bf16.mxu0 %v642
      %1197 = vmatpush1.bf16.msra.mxu0 %v641
      %1198 = vmatprep.subr.bf16.mxu0 %v646
      %1199 = vmatpush1.bf16.msra.mxu0 %v645
      %1200 = vmatprep.subr.bf16.mxu0 %v650
      %1201 = vmatpush1.bf16.msra.mxu0 %v649
      %1202 = vmatprep.subr.bf16.mxu0 %v654
      %1203 = vmatpush1.bf16.msra.mxu0 %v653
      %1204 = vmatprep.subr.bf16.mxu0 %v658
      %1205 = vmatpush1.bf16.msra.mxu0 %v657
      %1206 = vmatprep.subr.bf16.mxu0 %v662
      %1207 = vmatpush1.bf16.msra.mxu0 %v661
      %1208 = vmatprep.subr.bf16.mxu0 %v666
      %1209 = vmatpush1.bf16.msra.mxu0 %v665
      %1210 = vmatprep.subr.bf16.mxu0 %v670
      %1211 = vmatpush1.bf16.msra.mxu0 %v669
      %1212 = vmatprep.subr.bf16.mxu0 0
      %1213 = vmatpush1.bf16.msra.mxu0 0
      %1214 = vmatprep.subr.bf16.mxu0 0
      %1215 = vmatpush1.bf16.msra.mxu0 0
      %1216 = vmatprep.subr.bf16.mxu0 0
      %1217 = vmatpush1.bf16.msra.mxu0 0
      %1218 = vmatprep.subr.bf16.mxu0 0
      %1219 = vmatpush1.bf16.msra.mxu0 0
      %1220 = vmatprep.subr.bf16.mxu0 0
      %1221 = vmatpush1.bf16.msra.mxu0 0
      %1222 = vmatprep.subr.bf16.mxu0 0
      %1223 = vmatpush1.bf16.msra.mxu0 0
      %1224 = vmatprep.subr.bf16.mxu0 0
      %1225 = vmatpush1.bf16.msra.mxu0 0
      %1226 = vmatprep.subr.bf16.mxu0 0
      %1227 = vmatpush1.bf16.msra.mxu0 0
      %1228 = vmatprep.mubr.bf16.mxu0 0
      %1229 = vmatmul.mubr.bf16.gmra.mrb[0].mxu0 %v1195
      %v1230 = vpop.f32.mrb[0].mxu0
      %v1231 = vadd.f32 0.0, %v1230
      %v1232 = vpop.f32.mrb[0].mxu0
      %v1233 = vadd.f32 0.0, %v1232
      %v1234 = vpop.f32.mrb[0].mxu0
      %v1235 = vpop.f32.mrb[0].mxu0
      %1236 = vdwg.mxu0
      %1237 = vmatprep.subr.bf16.mxu0 %v644
      %1238 = vmatpush1.bf16.msra.mxu0 %v643
      %1239 = vmatprep.subr.bf16.mxu0 %v648
      %1240 = vmatpush1.bf16.msra.mxu0 %v647
      %1241 = vmatprep.subr.bf16.mxu0 %v652
      %1242 = vmatpush1.bf16.msra.mxu0 %v651
      %1243 = vmatprep.subr.bf16.mxu0 %v656
      %1244 = vmatpush1.bf16.msra.mxu0 %v655
      %1245 = vmatprep.subr.bf16.mxu0 %v660
      %1246 = vmatpush1.bf16.msra.mxu0 %v659
      %1247 = vmatprep.subr.bf16.mxu0 %v664
      %1248 = vmatpush1.bf16.msra.mxu0 %v663
      %1249 = vmatprep.subr.bf16.mxu0 %v668
      %1250 = vmatpush1.bf16.msra.mxu0 %v667
      %1251 = vmatprep.subr.bf16.mxu0 %v672
      %1252 = vmatpush1.bf16.msra.mxu0 %v671
      %1253 = vmatprep.subr.bf16.mxu0 0
      %1254 = vmatpush1.bf16.msra.mxu0 0
      %1255 = vmatprep.subr.bf16.mxu0 0
      %1256 = vmatpush1.bf16.msra.mxu0 0
      %1257 = vmatprep.subr.bf16.mxu0 0
      %1258 = vmatpush1.bf16.msra.mxu0 0
      %1259 = vmatprep.subr.bf16.mxu0 0
      %1260 = vmatpush1.bf16.msra.mxu0 0
      %1261 = vmatprep.subr.bf16.mxu0 0
      %1262 = vmatpush1.bf16.msra.mxu0 0
      %1263 = vmatprep.subr.bf16.mxu0 0
      %1264 = vmatpush1.bf16.msra.mxu0 0
      %1265 = vmatprep.subr.bf16.mxu0 0
      %1266 = vmatpush1.bf16.msra.mxu0 0
      %1267 = vmatprep.subr.bf16.mxu0 0
      %1268 = vmatpush1.bf16.msra.mxu0 0
      %1269 = vmatprep.mubr.bf16.mxu0 0
      %1270 = vmatmul.mubr.bf16.gmra.mrb[0].mxu0 %v1195
      %v1271 = vpop.f32.mrb[0].mxu0
      %v1272 = vadd.f32 0.0, %v1271
      %v1273 = vpop.f32.mrb[0].mxu0
      %v1274 = vadd.f32 0.0, %v1273
      %v1275 = vpop.f32.mrb[0].mxu0
      %v1276 = vpop.f32.mrb[0].mxu0
      %1277 = vdwg.mxu0
      %v1278 = vadd.f32 %v1190, %v1231
      %v1279 = vadd.f32 %v1191, %v1233
      %v1280 = vadd.f32 %v1192, %v1272
      %v1281 = vadd.f32 %v1193, %v1274
      %v1282 = vxor.u32 %v1278, 2147483648
      %v1283 = vmul.f32 %v1282, 1.442695
      %v1284 = vpow.pop %v1283
      %v1285 = vadd.f32 %v1284, 1.0
      %v1286 = vrcp.pop %v1285
      %v1287 = vmul.f32 1.0, %v1286
      %v1288 = vxor.u32 %v1279, 2147483648
      %v1289 = vmul.f32 %v1288, 1.442695
      %v1290 = vpow.pop %v1289
      %v1291 = vadd.f32 %v1290, 1.0
      %v1292 = vrcp.pop %v1291
      %v1293 = vmul.f32 1.0, %v1292
      %v1294 = vtanh.pop %v1280
      %v1295 = vxor.u32 %v1281, 2147483648
      %v1296 = vmul.f32 %v1295, 1.442695
      %v1297 = vpow.pop %v1296
      %v1298 = vadd.f32 %v1297, 1.0
      %v1299 = vrcp.pop %v1298
      %v1300 = vmul.f32 1.0, %v1299
      %v1301 = vld [vmem:[#allocation5] sm:$0xff]
      %v1302 = vmul.f32 %v1293, %v1301
      %v1303 = vmul.f32 %v1287, %v1294
      %v1304 = vadd.f32 %v1302, %v1303
      %v1305 = vtanh.pop %v1304
      %v1306 = vmul.f32 %v1300, %v1305
      %1307 = vst [vmem:[#allocation5] sm:$0xff] %v1304
      %1308 = vst [vmem:[#allocation4] sm:$0xff] %v1306
      %v1309 = vpack.c.bf16 %v1306, %v1306
      %s1310 = scalar_lea.vmem [#allocation2], 16
      %1311 = vst [vmem:[%s1310] sm:$0xf] %v1309
      %s1312 = scalar_lea.vmem [#allocation3], 160
      %v1313 = vld [vmem:[%s1312] sm:$0xff]
      %v1314 = vld [vmem:[%s1312 + $0x8] sm:$0xff]
      %v1315 = vld [vmem:[%s1312 + $0x10] sm:$0xff]
      %v1316 = vld [vmem:[%s1312 + $0x18] sm:$0xff]
      %v1317 = vld [vmem:[#allocation4] sm:$0xff]
      %v1318 = vpack.c.bf16 %v1317, %v1317
      %1319 = vmatprep.subr.bf16.mxu0 %v642
      %1320 = vmatpush1.bf16.msra.mxu0 %v641
      %1321 = vmatprep.subr.bf16.mxu0 %v646
      %1322 = vmatpush1.bf16.msra.mxu0 %v645
      %1323 = vmatprep.subr.bf16.mxu0 %v650
      %1324 = vmatpush1.bf16.msra.mxu0 %v649
      %1325 = vmatprep.subr.bf16.mxu0 %v654
      %1326 = vmatpush1.bf16.msra.mxu0 %v653
      %1327 = vmatprep.subr.bf16.mxu0 %v658
      %1328 = vmatpush1.bf16.msra.mxu0 %v657
      %1329 = vmatprep.subr.bf16.mxu0 %v662
      %1330 = vmatpush1.bf16.msra.mxu0 %v661
      %1331 = vmatprep.subr.bf16.mxu0 %v666
      %1332 = vmatpush1.bf16.msra.mxu0 %v665
      %1333 = vmatprep.subr.bf16.mxu0 %v670
      %1334 = vmatpush1.bf16.msra.mxu0 %v669
      %1335 = vmatprep.subr.bf16.mxu0 0
      %1336 = vmatpush1.bf16.msra.mxu0 0
      %1337 = vmatprep.subr.bf16.mxu0 0
      %1338 = vmatpush1.bf16.msra.mxu0 0
      %1339 = vmatprep.subr.bf16.mxu0 0
      %1340 = vmatpush1.bf16.msra.mxu0 0
      %1341 = vmatprep.subr.bf16.mxu0 0
      %1342 = vmatpush1.bf16.msra.mxu0 0
      %1343 = vmatprep.subr.bf16.mxu0 0
      %1344 = vmatpush1.bf16.msra.mxu0 0
      %1345 = vmatprep.subr.bf16.mxu0 0
      %1346 = vmatpush1.bf16.msra.mxu0 0
      %1347 = vmatprep.subr.bf16.mxu0 0
      %1348 = vmatpush1.bf16.msra.mxu0 0
      %1349 = vmatprep.subr.bf16.mxu0 0
      %1350 = vmatpush1.bf16.msra.mxu0 0
      %1351 = vmatprep.mubr.bf16.mxu0 0
      %1352 = vmatmul.mubr.bf16.gmra.mrb[0].mxu0 %v1318
      %v1353 = vpop.f32.mrb[0].mxu0
      %v1354 = vadd.f32 0.0, %v1353
      %v1355 = vpop.f32.mrb[0].mxu0
      %v1356 = vadd.f32 0.0, %v1355
      %v1357 = vpop.f32.mrb[0].mxu0
      %v1358 = vpop.f32.mrb[0].mxu0
      %1359 = vdwg.mxu0
      %1360 = vmatprep.subr.bf16.mxu0 %v644
      %1361 = vmatpush1.bf16.msra.mxu0 %v643
      %1362 = vmatprep.subr.bf16.mxu0 %v648
      %1363 = vmatpush1.bf16.msra.mxu0 %v647
      %1364 = vmatprep.subr.bf16.mxu0 %v652
      %1365 = vmatpush1.bf16.msra.mxu0 %v651
      %1366 = vmatprep.subr.bf16.mxu0 %v656
      %1367 = vmatpush1.bf16.msra.mxu0 %v655
      %1368 = vmatprep.subr.bf16.mxu0 %v660
      %1369 = vmatpush1.bf16.msra.mxu0 %v659
      %1370 = vmatprep.subr.bf16.mxu0 %v664
      %1371 = vmatpush1.bf16.msra.mxu0 %v663
      %1372 = vmatprep.subr.bf16.mxu0 %v668
      %1373 = vmatpush1.bf16.msra.mxu0 %v667
      %1374 = vmatprep.subr.bf16.mxu0 %v672
      %1375 = vmatpush1.bf16.msra.mxu0 %v671
      %1376 = vmatprep.subr.bf16.mxu0 0
      %1377 = vmatpush1.bf16.msra.mxu0 0
      %1378 = vmatprep.subr.bf16.mxu0 0
      %1379 = vmatpush1.bf16.msra.mxu0 0
      %1380 = vmatprep.subr.bf16.mxu0 0
      %1381 = vmatpush1.bf16.msra.mxu0 0
      %1382 = vmatprep.subr.bf16.mxu0 0
      %1383 = vmatpush1.bf16.msra.mxu0 0
      %1384 = vmatprep.subr.bf16.mxu0 0
      %1385 = vmatpush1.bf16.msra.mxu0 0
      %1386 = vmatprep.subr.bf16.mxu0 0
      %1387 = vmatpush1.bf16.msra.mxu0 0
      %1388 = vmatprep.subr.bf16.mxu0 0
      %1389 = vmatpush1.bf16.msra.mxu0 0
      %1390 = vmatprep.subr.bf16.mxu0 0
      %1391 = vmatpush1.bf16.msra.mxu0 0
      %1392 = vmatprep.mubr.bf16.mxu0 0
      %1393 = vmatmul.mubr.bf16.gmra.mrb[0].mxu0 %v1318
      %v1394 = vpop.f32.mrb[0].mxu0
      %v1395 = vadd.f32 0.0, %v1394
      %v1396 = vpop.f32.mrb[0].mxu0
      %v1397 = vadd.f32 0.0, %v1396
      %v1398 = vpop.f32.mrb[0].mxu0
      %v1399 = vpop.f32.mrb[0].mxu0
      %1400 = vdwg.mxu0
      %v1401 = vadd.f32 %v1313, %v1354
      %v1402 = vadd.f32 %v1314, %v1356
      %v1403 = vadd.f32 %v1315, %v1395
      %v1404 = vadd.f32 %v1316, %v1397
      %v1405 = vxor.u32 %v1401, 2147483648
      %v1406 = vmul.f32 %v1405, 1.442695
      %v1407 = vpow.pop %v1406
      %v1408 = vadd.f32 %v1407, 1.0
      %v1409 = vrcp.pop %v1408
      %v1410 = vmul.f32 1.0, %v1409
      %v1411 = vxor.u32 %v1402, 2147483648
      %v1412 = vmul.f32 %v1411, 1.442695
      %v1413 = vpow.pop %v1412
      %v1414 = vadd.f32 %v1413, 1.0
      %v1415 = vrcp.pop %v1414
      %v1416 = vmul.f32 1.0, %v1415
      %v1417 = vtanh.pop %v1403
      %v1418 = vxor.u32 %v1404, 2147483648
      %v1419 = vmul.f32 %v1418, 1.442695
      %v1420 = vpow.pop %v1419
      %v1421 = vadd.f32 %v1420, 1.0
      %v1422 = vrcp.pop %v1421
      %v1423 = vmul.f32 1.0, %v1422
      %v1424 = vld [vmem:[#allocation5] sm:$0xff]
      %v1425 = vmul.f32 %v1416, %v1424
      %v1426 = vmul.f32 %v1410, %v1417
      %v1427 = vadd.f32 %v1425, %v1426
      %v1428 = vtanh.pop %v1427
      %v1429 = vmul.f32 %v1423, %v1428
      %1430 = vst [vmem:[#allocation5] sm:$0xff] %v1427
      %1431 = vst [vmem:[#allocation4] sm:$0xff] %v1429
      %v1432 = vpack.c.bf16 %v1429, %v1429
      %s1433 = scalar_lea.vmem [#allocation2], 20
      %1434 = vst [vmem:[%s1433] sm:$0xf] %v1432
      %s1435 = scalar_lea.vmem [#allocation3], 192
      %v1436 = vld [vmem:[%s1435] sm:$0xff]
      %v1437 = vld [vmem:[%s1435 + $0x8] sm:$0xff]
      %v1438 = vld [vmem:[%s1435 + $0x10] sm:$0xff]
      %v1439 = vld [vmem:[%s1435 + $0x18] sm:$0xff]
      %v1440 = vld [vmem:[#allocation4] sm:$0xff]
      %v1441 = vpack.c.bf16 %v1440, %v1440
      %1442 = vmatprep.subr.bf16.mxu0 %v642
      %1443 = vmatpush1.bf16.msra.mxu0 %v641
      %1444 = vmatprep.subr.bf16.mxu0 %v646
      %1445 = vmatpush1.bf16.msra.mxu0 %v645
      %1446 = vmatprep.subr.bf16.mxu0 %v650
      %1447 = vmatpush1.bf16.msra.mxu0 %v649
      %1448 = vmatprep.subr.bf16.mxu0 %v654
      %1449 = vmatpush1.bf16.msra.mxu0 %v653
      %1450 = vmatprep.subr.bf16.mxu0 %v658
      %1451 = vmatpush1.bf16.msra.mxu0 %v657
      %1452 = vmatprep.subr.bf16.mxu0 %v662
      %1453 = vmatpush1.bf16.msra.mxu0 %v661
      %1454 = vmatprep.subr.bf16.mxu0 %v666
      %1455 = vmatpush1.bf16.msra.mxu0 %v665
      %1456 = vmatprep.subr.bf16.mxu0 %v670
      %1457 = vmatpush1.bf16.msra.mxu0 %v669
      %1458 = vmatprep.subr.bf16.mxu0 0
      %1459 = vmatpush1.bf16.msra.mxu0 0
      %1460 = vmatprep.subr.bf16.mxu0 0
      %1461 = vmatpush1.bf16.msra.mxu0 0
      %1462 = vmatprep.subr.bf16.mxu0 0
      %1463 = vmatpush1.bf16.msra.mxu0 0
      %1464 = vmatprep.subr.bf16.mxu0 0
      %1465 = vmatpush1.bf16.msra.mxu0 0
      %1466 = vmatprep.subr.bf16.mxu0 0
      %1467 = vmatpush1.bf16.msra.mxu0 0
      %1468 = vmatprep.subr.bf16.mxu0 0
      %1469 = vmatpush1.bf16.msra.mxu0 0
      %1470 = vmatprep.subr.bf16.mxu0 0
      %1471 = vmatpush1.bf16.msra.mxu0 0
      %1472 = vmatprep.subr.bf16.mxu0 0
      %1473 = vmatpush1.bf16.msra.mxu0 0
      %1474 = vmatprep.mubr.bf16.mxu0 0
      %1475 = vmatmul.mubr.bf16.gmra.mrb[0].mxu0 %v1441
      %v1476 = vpop.f32.mrb[0].mxu0
      %v1477 = vadd.f32 0.0, %v1476
      %v1478 = vpop.f32.mrb[0].mxu0
      %v1479 = vadd.f32 0.0, %v1478
      %v1480 = vpop.f32.mrb[0].mxu0
      %v1481 = vpop.f32.mrb[0].mxu0
      %1482 = vdwg.mxu0
      %1483 = vmatprep.subr.bf16.mxu0 %v644
      %1484 = vmatpush1.bf16.msra.mxu0 %v643
      %1485 = vmatprep.subr.bf16.mxu0 %v648
      %1486 = vmatpush1.bf16.msra.mxu0 %v647
      %1487 = vmatprep.subr.bf16.mxu0 %v652
      %1488 = vmatpush1.bf16.msra.mxu0 %v651
      %1489 = vmatprep.subr.bf16.mxu0 %v656
      %1490 = vmatpush1.bf16.msra.mxu0 %v655
      %1491 = vmatprep.subr.bf16.mxu0 %v660
      %1492 = vmatpush1.bf16.msra.mxu0 %v659
      %1493 = vmatprep.subr.bf16.mxu0 %v664
      %1494 = vmatpush1.bf16.msra.mxu0 %v663
      %1495 = vmatprep.subr.bf16.mxu0 %v668
      %1496 = vmatpush1.bf16.msra.mxu0 %v667
      %1497 = vmatprep.subr.bf16.mxu0 %v672
      %1498 = vmatpush1.bf16.msra.mxu0 %v671
      %1499 = vmatprep.subr.bf16.mxu0 0
      %1500 = vmatpush1.bf16.msra.mxu0 0
      %1501 = vmatprep.subr.bf16.mxu0 0
      %1502 = vmatpush1.bf16.msra.mxu0 0
      %1503 = vmatprep.subr.bf16.mxu0 0
      %1504 = vmatpush1.bf16.msra.mxu0 0
      %1505 = vmatprep.subr.bf16.mxu0 0
      %1506 = vmatpush1.bf16.msra.mxu0 0
      %1507 = vmatprep.subr.bf16.mxu0 0
      %1508 = vmatpush1.bf16.msra.mxu0 0
      %1509 = vmatprep.subr.bf16.mxu0 0
      %1510 = vmatpush1.bf16.msra.mxu0 0
      %1511 = vmatprep.subr.bf16.mxu0 0
      %1512 = vmatpush1.bf16.msra.mxu0 0
      %1513 = vmatprep.subr.bf16.mxu0 0
      %1514 = vmatpush1.bf16.msra.mxu0 0
      %1515 = vmatprep.mubr.bf16.mxu0 0
      %1516 = vmatmul.mubr.bf16.gmra.mrb[0].mxu0 %v1441
      %v1517 = vpop.f32.mrb[0].mxu0
      %v1518 = vadd.f32 0.0, %v1517
      %v1519 = vpop.f32.mrb[0].mxu0
      %v1520 = vadd.f32 0.0, %v1519
      %v1521 = vpop.f32.mrb[0].mxu0
      %v1522 = vpop.f32.mrb[0].mxu0
      %1523 = vdwg.mxu0
      %v1524 = vadd.f32 %v1436, %v1477
      %v1525 = vadd.f32 %v1437, %v1479
      %v1526 = vadd.f32 %v1438, %v1518
      %v1527 = vadd.f32 %v1439, %v1520
      %v1528 = vxor.u32 %v1524, 2147483648
      %v1529 = vmul.f32 %v1528, 1.442695
      %v1530 = vpow.pop %v1529
      %v1531 = vadd.f32 %v1530, 1.0
      %v1532 = vrcp.pop %v1531
      %v1533 = vmul.f32 1.0, %v1532
      %v1534 = vxor.u32 %v1525, 2147483648
      %v1535 = vmul.f32 %v1534, 1.442695
      %v1536 = vpow.pop %v1535
      %v1537 = vadd.f32 %v1536, 1.0
      %v1538 = vrcp.pop %v1537
      %v1539 = vmul.f32 1.0, %v1538
      %v1540 = vtanh.pop %v1526
      %v1541 = vxor.u32 %v1527, 2147483648
      %v1542 = vmul.f32 %v1541, 1.442695
      %v1543 = vpow.pop %v1542
      %v1544 = vadd.f32 %v1543, 1.0
      %v1545 = vrcp.pop %v1544
      %v1546 = vmul.f32 1.0, %v1545
      %v1547 = vld [vmem:[#allocation5] sm:$0xff]
      %v1548 = vmul.f32 %v1539, %v1547
      %v1549 = vmul.f32 %v1533, %v1540
      %v1550 = vadd.f32 %v1548, %v1549
      %v1551 = vtanh.pop %v1550
      %v1552 = vmul.f32 %v1546, %v1551
      %1553 = vst [vmem:[#allocation5] sm:$0xff] %v1550
      %1554 = vst [vmem:[#allocation4] sm:$0xff] %v1552
      %v1555 = vpack.c.bf16 %v1552, %v1552
      %s1556 = scalar_lea.vmem [#allocation2], 24
      %1557 = vst [vmem:[%s1556] sm:$0xf] %v1555
      %s1558 = scalar_lea.vmem [#allocation3], 224
      %v1559 = vld [vmem:[%s1558] sm:$0xff]
      %v1560 = vld [vmem:[%s1558 + $0x8] sm:$0xff]
      %v1561 = vld [vmem:[%s1558 + $0x10] sm:$0xff]
      %v1562 = vld [vmem:[%s1558 + $0x18] sm:$0xff]
      %v1563 = vld [vmem:[#allocation4] sm:$0xff]
      %v1564 = vpack.c.bf16 %v1563, %v1563
      %1565 = vmatprep.subr.bf16.mxu0 %v642
      %1566 = vmatpush1.bf16.msra.mxu0 %v641
      %1567 = vmatprep.subr.bf16.mxu0 %v646
      %1568 = vmatpush1.bf16.msra.mxu0 %v645
      %1569 = vmatprep.subr.bf16.mxu0 %v650
      %1570 = vmatpush1.bf16.msra.mxu0 %v649
      %1571 = vmatprep.subr.bf16.mxu0 %v654
      %1572 = vmatpush1.bf16.msra.mxu0 %v653
      %1573 = vmatprep.subr.bf16.mxu0 %v658
      %1574 = vmatpush1.bf16.msra.mxu0 %v657
      %1575 = vmatprep.subr.bf16.mxu0 %v662
      %1576 = vmatpush1.bf16.msra.mxu0 %v661
      %1577 = vmatprep.subr.bf16.mxu0 %v666
      %1578 = vmatpush1.bf16.msra.mxu0 %v665
      %1579 = vmatprep.subr.bf16.mxu0 %v670
      %1580 = vmatpush1.bf16.msra.mxu0 %v669
      %1581 = vmatprep.subr.bf16.mxu0 0
      %1582 = vmatpush1.bf16.msra.mxu0 0
      %1583 = vmatprep.subr.bf16.mxu0 0
      %1584 = vmatpush1.bf16.msra.mxu0 0
      %1585 = vmatprep.subr.bf16.mxu0 0
      %1586 = vmatpush1.bf16.msra.mxu0 0
      %1587 = vmatprep.subr.bf16.mxu0 0
      %1588 = vmatpush1.bf16.msra.mxu0 0
      %1589 = vmatprep.subr.bf16.mxu0 0
      %1590 = vmatpush1.bf16.msra.mxu0 0
      %1591 = vmatprep.subr.bf16.mxu0 0
      %1592 = vmatpush1.bf16.msra.mxu0 0
      %1593 = vmatprep.subr.bf16.mxu0 0
      %1594 = vmatpush1.bf16.msra.mxu0 0
      %1595 = vmatprep.subr.bf16.mxu0 0
      %1596 = vmatpush1.bf16.msra.mxu0 0
      %1597 = vmatprep.mubr.bf16.mxu0 0
      %1598 = vmatmul.mubr.bf16.gmra.mrb[0].mxu0 %v1564
      %v1599 = vpop.f32.mrb[0].mxu0
      %v1600 = vadd.f32 0.0, %v1599
      %v1601 = vpop.f32.mrb[0].mxu0
      %v1602 = vadd.f32 0.0, %v1601
      %v1603 = vpop.f32.mrb[0].mxu0
      %v1604 = vpop.f32.mrb[0].mxu0
      %1605 = vdwg.mxu0
      %1606 = vmatprep.subr.bf16.mxu0 %v644
      %1607 = vmatpush1.bf16.msra.mxu0 %v643
      %1608 = vmatprep.subr.bf16.mxu0 %v648
      %1609 = vmatpush1.bf16.msra.mxu0 %v647
      %1610 = vmatprep.subr.bf16.mxu0 %v652
      %1611 = vmatpush1.bf16.msra.mxu0 %v651
      %1612 = vmatprep.subr.bf16.mxu0 %v656
      %1613 = vmatpush1.bf16.msra.mxu0 %v655
      %1614 = vmatprep.subr.bf16.mxu0 %v660
      %1615 = vmatpush1.bf16.msra.mxu0 %v659
      %1616 = vmatprep.subr.bf16.mxu0 %v664
      %1617 = vmatpush1.bf16.msra.mxu0 %v663
      %1618 = vmatprep.subr.bf16.mxu0 %v668
      %1619 = vmatpush1.bf16.msra.mxu0 %v667
      %1620 = vmatprep.subr.bf16.mxu0 %v672
      %1621 = vmatpush1.bf16.msra.mxu0 %v671
      %1622 = vmatprep.subr.bf16.mxu0 0
      %1623 = vmatpush1.bf16.msra.mxu0 0
      %1624 = vmatprep.subr.bf16.mxu0 0
      %1625 = vmatpush1.bf16.msra.mxu0 0
      %1626 = vmatprep.subr.bf16.mxu0 0
      %1627 = vmatpush1.bf16.msra.mxu0 0
      %1628 = vmatprep.subr.bf16.mxu0 0
      %1629 = vmatpush1.bf16.msra.mxu0 0
      %1630 = vmatprep.subr.bf16.mxu0 0
      %1631 = vmatpush1.bf16.msra.mxu0 0
      %1632 = vmatprep.subr.bf16.mxu0 0
      %1633 = vmatpush1.bf16.msra.mxu0 0
      %1634 = vmatprep.subr.bf16.mxu0 0
      %1635 = vmatpush1.bf16.msra.mxu0 0
      %1636 = vmatprep.subr.bf16.mxu0 0
      %1637 = vmatpush1.bf16.msra.mxu0 0
      %1638 = vmatprep.mubr.bf16.mxu0 0
      %1639 = vmatmul.mubr.bf16.gmra.mrb[0].mxu0 %v1564
      %v1640 = vpop.f32.mrb[0].mxu0
      %v1641 = vadd.f32 0.0, %v1640
      %v1642 = vpop.f32.mrb[0].mxu0
      %v1643 = vadd.f32 0.0, %v1642
      %v1644 = vpop.f32.mrb[0].mxu0
      %v1645 = vpop.f32.mrb[0].mxu0
      %1646 = vdwg.mxu0
      %v1647 = vadd.f32 %v1559, %v1600
      %v1648 = vadd.f32 %v1560, %v1602
      %v1649 = vadd.f32 %v1561, %v1641
      %v1650 = vadd.f32 %v1562, %v1643
      %v1651 = vxor.u32 %v1647, 2147483648
      %v1652 = vmul.f32 %v1651, 1.442695
      %v1653 = vpow.pop %v1652
      %v1654 = vadd.f32 %v1653, 1.0
      %v1655 = vrcp.pop %v1654
      %v1656 = vmul.f32 1.0, %v1655
      %v1657 = vxor.u32 %v1648, 2147483648
      %v1658 = vmul.f32 %v1657, 1.442695
      %v1659 = vpow.pop %v1658
      %v1660 = vadd.f32 %v1659, 1.0
      %v1661 = vrcp.pop %v1660
      %v1662 = vmul.f32 1.0, %v1661
      %v1663 = vtanh.pop %v1649
      %v1664 = vxor.u32 %v1650, 2147483648
      %v1665 = vmul.f32 %v1664, 1.442695
      %v1666 = vpow.pop %v1665
      %v1667 = vadd.f32 %v1666, 1.0
      %v1668 = vrcp.pop %v1667
      %v1669 = vmul.f32 1.0, %v1668
      %v1670 = vld [vmem:[#allocation5] sm:$0xff]
      %v1671 = vmul.f32 %v1662, %v1670
      %v1672 = vmul.f32 %v1656, %v1663
      %v1673 = vadd.f32 %v1671, %v1672
      %v1674 = vtanh.pop %v1673
      %v1675 = vmul.f32 %v1669, %v1674
      %1676 = vst [vmem:[#allocation5] sm:$0xff] %v1673
      %1677 = vst [vmem:[#allocation4] sm:$0xff] %v1675
      %v1678 = vpack.c.bf16 %v1675, %v1675
      %s1679 = scalar_lea.vmem [#allocation2], 28
      %1680 = vst [vmem:[%s1679] sm:$0xf] %v1678
    $region38: #{forest_intelligence_forward.1} parent=1 // loop_footer
      %s73 = sadd.s32 1, %s69
    $region39: #{forest_intelligence_forward.1} parent=1 // loop_footer_branch
      %68 = sbr.rel target = $region35
    $region40: #{forest_intelligence_forward.1} parent=1 // loop_exit
      _
    %v1681 = vld [vmem:[#allocation4] sm:$0xff]
    %v1682 = vpack.c.bf16 %v1681, %v1681
    %v1683 = vld [vmem:[%s4] sm:$0xf]
    %v1684 = vld [vmem:[%s4 + $0x4] sm:$0xf]
    %v1685 = vld [vmem:[%s4 + $0x8] sm:$0xf]
    %v1686 = vld [vmem:[%s4 + $0xc] sm:$0xf]
    %v1687 = vld [vmem:[%s4 + $0x10] sm:$0xf]
    %v1688 = vld [vmem:[%s4 + $0x14] sm:$0xf]
    %v1689 = vld [vmem:[%s4 + $0x18] sm:$0xf]
    %v1690 = vld [vmem:[%s4 + $0x1c] sm:$0xf]
    %v1691 = vld [vmem:[%s4 + $0x20] sm:$0xf]
    %v1692 = vld [vmem:[%s4 + $0x24] sm:$0xf]
    %v1693 = vld [vmem:[%s4 + $0x28] sm:$0xf]
    %v1694 = vld [vmem:[%s4 + $0x2c] sm:$0xf]
    %v1695 = vld [vmem:[%s4 + $0x30] sm:$0xf]
    %v1696 = vld [vmem:[%s4 + $0x34] sm:$0xf]
    %v1697 = vld [vmem:[%s4 + $0x38] sm:$0xf]
    %v1698 = vld [vmem:[%s4 + $0x3c] sm:$0xf]
    %v1699 = vld [vmem:[%s5] sm:$0x1]
    %v1701 = vlaneseq
    %v1702 = vshrl.u32 %v1701, 7
    %v1703 = vsub.s32 0, %v1702
    %v1704 = vrot.slane %v1699, %v1703
    %v1722 = vunpack.c.l.b16 %v1683
    %v1723 = vunpack.c.l.b16 %v1684
    %v1724 = vunpack.c.l.b16 %v1685
    %v1725 = vunpack.c.l.b16 %v1686
    %v1726 = vunpack.c.l.b16 %v1687
    %v1727 = vunpack.c.l.b16 %v1688
    %v1728 = vunpack.c.l.b16 %v1689
    %v1729 = vunpack.c.l.b16 %v1690
    %v1730 = vunpack.c.l.b16 %v1691
    %v1731 = vunpack.c.l.b16 %v1692
    %v1732 = vunpack.c.l.b16 %v1693
    %v1733 = vunpack.c.l.b16 %v1694
    %v1734 = vunpack.c.l.b16 %v1695
    %v1735 = vunpack.c.l.b16 %v1696
    %v1736 = vunpack.c.l.b16 %v1697
    %v1737 = vunpack.c.l.b16 %v1698
    %v1738 = vpack.c.b16 %v1723, %v1722
    %v1739 = vpack.c.b16 %v1725, %v1724
    %v1740 = vpack.c.b16 %v1727, %v1726
    %v1741 = vpack.c.b16 %v1729, %v1728
    %v1742 = vpack.c.b16 %v1731, %v1730
    %v1743 = vpack.c.b16 %v1733, %v1732
    %v1744 = vpack.c.b16 %v1735, %v1734
    %v1745 = vpack.c.b16 %v1737, %v1736
    %1754 = vmatprep.subr.bf16.mxu0 0
    %1755 = vmatpush1.bf16.msra.mxu0 %v1738
    %1756 = vmatprep.subr.bf16.mxu0 0
    %1757 = vmatpush1.bf16.msra.mxu0 %v1739
    %1758 = vmatprep.subr.bf16.mxu0 0
    %1759 = vmatpush1.bf16.msra.mxu0 %v1740
    %1760 = vmatprep.subr.bf16.mxu0 0
    %1761 = vmatpush1.bf16.msra.mxu0 %v1741
    %1762 = vmatprep.subr.bf16.mxu0 0
    %1763 = vmatpush1.bf16.msra.mxu0 %v1742
    %1764 = vmatprep.subr.bf16.mxu0 0
    %1765 = vmatpush1.bf16.msra.mxu0 %v1743
    %1766 = vmatprep.subr.bf16.mxu0 0
    %1767 = vmatpush1.bf16.msra.mxu0 %v1744
    %1768 = vmatprep.subr.bf16.mxu0 0
    %1769 = vmatpush1.bf16.msra.mxu0 %v1745
    %1770 = vmatprep.subr.bf16.mxu0 0
    %1771 = vmatpush1.bf16.msra.mxu0 0
    %1772 = vmatprep.subr.bf16.mxu0 0
    %1773 = vmatpush1.bf16.msra.mxu0 0
    %1774 = vmatprep.subr.bf16.mxu0 0
    %1775 = vmatpush1.bf16.msra.mxu0 0
    %1776 = vmatprep.subr.bf16.mxu0 0
    %1777 = vmatpush1.bf16.msra.mxu0 0
    %1778 = vmatprep.subr.bf16.mxu0 0
    %1779 = vmatpush1.bf16.msra.mxu0 0
    %1780 = vmatprep.subr.bf16.mxu0 0
    %1781 = vmatpush1.bf16.msra.mxu0 0
    %1782 = vmatprep.subr.bf16.mxu0 0
    %1783 = vmatpush1.bf16.msra.mxu0 0
    %1784 = vmatprep.subr.bf16.mxu0 0
    %1785 = vmatpush1.bf16.msra.mxu0 0
    %1786 = vmatprep.mubr.bf16.mxu0 0
    %1787 = vmatmul.mubr.bf16.gmra.mrb[0].mxu0 %v1682
    %v1788 = vpop.f32.mrb[0].mxu0
    %v1789 = vadd.f32 %v1704, %v1788
    %v1790 = vpop.f32.mrb[0].mxu0
    %v1791 = vpop.f32.mrb[0].mxu0
    %v1792 = vpop.f32.mrb[0].mxu0
    %1793 = vdwg.mxu0
    %1794 = vst [vmem:[%s6] sm:$0xff] %v1789
    // Predicated region
    $region41: #{forest_intelligence_forward.1} parent=1 // pred_check
      _
    $region42: #{forest_intelligence_forward.1} parent=1 // pred_check_branch
      %1796 = sbr.rel (0) target = $region44
    $region43: #{forest_intelligence_forward.1} parent=1 // pred_region
      _
    $region44: #{forest_intelligence_forward.1} parent=1 // pred_fallthru
      _
    // Predicated region
    $region45: #{forest_intelligence_forward.1} parent=1 // pred_check
      _
    $region46: #{forest_intelligence_forward.1} parent=1 // pred_check_branch
      %1798 = sbr.rel (0) target = $region48
    $region47: #{forest_intelligence_forward.1} parent=1 // pred_region
      _
    $region48: #{forest_intelligence_forward.1} parent=1 // pred_fallthru
      _
    %1799 = vsyncpa [#allocation7], 1
    %1800 = vsyncpa [#allocation9], 1

</llo_original>
